<compile_context>
chip_gen: v7x
topology: tpu7x:2x2x1
jax: 0.10.0
libtpu: 0.0.40
codegen_flags: <defaults>
</compile_context>

<pallas_src>
import jax
import jax.numpy as jnp
from jax.experimental import pallas as pl
from jax.experimental.pallas import tpu as pltpu


def _round_up(x, m):
    return ((x + m - 1) // m) * m


def _kernel(pts_ref, sty_ref,
            w1_ref, b1_ref, w2_ref, b2_ref,
            w3g_ref, w3s_ref, b3_ref,
            w4_ref, b4_ref,
            w5t_ref, b5_ref,
            wp_ref, bp_ref,
            out_ref):
    x = pts_ref[...]                               # (TN, 3)  f32
    s = sty_ref[...].astype(jnp.bfloat16)          # (TN, S)  cast per-tile (VPU)

    # geom_encoder[0]: Linear(3, 64).  K=3 -> unrolled VPU FMAs (MXU would be
    # ~2% utilized here; the VPU slot is otherwise idle).
    w1 = w1_ref[...]                               # (3, 64)
    h = (x[:, 0:1] * w1[0:1, :]
         + x[:, 1:2] * w1[1:2, :]
         + x[:, 2:3] * w1[2:3, :]
         + b1_ref[...])
    h = jnp.maximum(h, 0.0)

    # geom_encoder[2]: Linear(64, 64) - bf16 operands, fp32 accumulation.
    geom = jnp.dot(h.astype(jnp.bfloat16), w2_ref[...],
                   preferred_element_type=jnp.float32) + b2_ref[...]

    # mlp[0]: Linear(64+S, 256) as geom@W3_g + style@W3_s (concat-free).
    h = (jnp.dot(geom.astype(jnp.bfloat16), w3g_ref[...],
                 preferred_element_type=jnp.float32)
         + jnp.dot(s, w3s_ref[...], preferred_element_type=jnp.float32)
         + b3_ref[...])
    h = jnp.maximum(h, 0.0)

    # mlp[2]: Linear(256, 128)
    h = jnp.dot(h.astype(jnp.bfloat16), w4_ref[...],
                preferred_element_type=jnp.float32) + b4_ref[...]
    h = jnp.maximum(h, 0.0)                        # (TN, 128) f32

    # mlp[4]: Linear(128, 3) + Sigmoid, off the MXU: broadcast-mul (VPU) +
    # lane reductions (XLU) + sigmoid (EUP).  Keeps MXU pushes for the wide
    # matmuls only.
    w5t = w5t_ref[...]                             # (3, 128) f32
    b5 = b5_ref[...]                               # (1, 3)   f32
    c0 = jax.nn.sigmoid(
        jnp.sum(h * w5t[0:1, :], axis=-1, keepdims=True) + b5[:, 0:1])
    c1 = jax.nn.sigmoid(
        jnp.sum(h * w5t[1:2, :], axis=-1, keepdims=True) + b5[:, 1:2])
    c2 = jax.nn.sigmoid(
        jnp.sum(h * w5t[2:3, :], axis=-1, keepdims=True) + b5[:, 2:3])

    # Packed output slab: [colors | proj_0 | ... | proj_{k-1} | small pad].
    # wp's first 3 columns are a 3x3 identity (bias 0), so the colors land in
    # the slab via the same 3-term FMA as the projectors.  One narrow store.
    wp = wp_ref[...]                               # (3, W_out)
    out_ref[...] = (c0 * wp[0:1, :]
                    + c1 * wp[1:2, :]
                    + c2 * wp[2:3, :]
                    + bp_ref[...])


def point_cloud_style_transfer_lite(points, style_feat, params, color_proj_dims,
                                    *, tile_n=2048):
    """Fused forward pass. Returns (colors (N,3), [proj_k of shape (N,1,dim_k)])."""
    N = points.shape[0]
    S = style_feat.shape[1]
    (w1, b1, w2, b2, w3g, w3s, b3, w4, b4, w5, b5, proj_ws, proj_bs) = params

    # --- pack projector weights + identity block into one narrow slab matrix.
    total_proj = int(sum(color_proj_dims))
    W_out = _round_up(3 + total_proj, 8)           # true packed width (no 128-pad)
    wp = jnp.zeros((3, W_out), jnp.float32).at[:, :3].set(
        jnp.eye(3, dtype=jnp.float32))
    bp = jnp.zeros((1, W_out), jnp.float32)
    off = 3
    for wk, bk, d in zip(proj_ws, proj_bs, color_proj_dims):
        wp = wp.at[:, off:off + d].set(wk)
        bp = bp.at[:, off:off + d].set(bk)
        off += d

    # --- bf16 operands for the MXU matmuls (fp32 accumulation in-kernel).
    #     Weights are tiny; casting them host-side is negligible.
    w2_b = w2.astype(jnp.bfloat16)
    w3g_b = w3g.astype(jnp.bfloat16)
    w3s_b = w3s.astype(jnp.bfloat16)
    w4_b = w4.astype(jnp.bfloat16)
    w5t = jnp.asarray(w5, jnp.float32).T           # (3, 128) for VPU/XLU path

    points = points.astype(jnp.float32)
    style_feat = style_feat.astype(jnp.float32)    # no separate bf16 HBM pass

    # --- tile selection: big tiles amortize per-grid-step overhead, but keep
    #     >= 2 grid steps when there is enough work (v7x has 2 TensorCores).
    tile_n = _round_up(max(8, int(tile_n)), 8)
    tile_n = min(tile_n, _round_up(N, 8))
    if N >= 1024 and pl.cdiv(N, tile_n) < 2:
        tile_n = min(tile_n, _round_up(pl.cdiv(N, 2), 8))
    grid = (pl.cdiv(N, tile_n),)                   # ragged tail handled by Pallas clipping

    def row_spec(d):
        return pl.BlockSpec((tile_n, d), lambda i: (i, 0))

    def full_spec(shape):
        return pl.BlockSpec(shape, lambda i: (0,) * len(shape))

    weights = [w1, b1, w2_b, b2, w3g_b, w3s_b, b3, w4_b, b4, w5t, b5, wp, bp]
    in_specs = [row_spec(3), row_spec(S)] + [full_spec(w.shape) for w in weights]

    flops = 2 * N * (3 * 64 + 64 * 64 + 64 * 256 + S * 256
                     + 256 * 128 + 128 * 3 + 3 * W_out)
    bytes_accessed = (N * 3 * 4                    # points (f32)
                      + N * S * 4                  # style  (f32, cast in-kernel)
                      + N * W_out * 4              # packed output (narrow, f32)
                      + sum(int(w.size) * w.dtype.itemsize for w in weights))

    out = pl.pallas_call(
        _kernel,
        grid=grid,
        in_specs=in_specs,
        out_specs=pl.BlockSpec((tile_n, W_out), lambda i: (i, 0)),
        out_shape=jax.ShapeDtypeStruct((N, W_out), jnp.float32),
        compiler_params=pltpu.CompilerParams(
            dimension_semantics=("parallel",),
            vmem_limit_bytes=48 * 1024 * 1024),    # safe on v7x's 64 MiB VMEM
        cost_estimate=pl.CostEstimate(
            flops=flops,
            transcendentals=3 * N,                 # sigmoid
            bytes_accessed=bytes_accessed),
    )(points, style_feat, *weights)

    # Split the packed slab back into the reference-shaped outputs.
    colors = out[:, :3]
    projected = []
    off = 3
    for d in color_proj_dims:
        projected.append(out[:, off:off + d][:, None, :])   # unsqueeze(1)
        off += d
    return colors, projected


def init_params(key, style_dim, color_proj_dims):
    """Deterministic parameter init; Linear weights stored as (in, out)."""
    def lin(k, din, dout):
        kw, kb = jax.random.split(k)
        scale = 1.0 / jnp.sqrt(din)
        w = jax.random.uniform(kw, (din, dout), jnp.float32, -scale, scale)
        b = jax.random.uniform(kb, (1, dout), jnp.float32, -scale, scale)
        return w, b

    keys = jax.random.split(key, 5 + len(color_proj_dims))
    w1, b1 = lin(keys[0], 3, 64)                  # geom_encoder[0]
    w2, b2 = lin(keys[1], 64, 64)                 # geom_encoder[2]
    w3, b3 = lin(keys[2], 64 + style_dim, 256)    # mlp[0]
    w3g, w3s = w3[:64, :], w3[64:, :]             # split for concat-free matmul
    w4, b4 = lin(keys[3], 256, 128)               # mlp[2]
    w5, b5 = lin(keys[4], 128, 3)                 # mlp[4]
    proj_ws, proj_bs = [], []
    for i, d in enumerate(color_proj_dims):
        wk, bk = lin(keys[5 + i], 3, d)
        proj_ws.append(wk)
        proj_bs.append(bk)
    return (w1, b1, w2, b2, w3g, w3s, b3, w4, b4, w5, b5, proj_ws, proj_bs)


def reference_forward(points, style_feat, params, color_proj_dims):
    """Pure-JAX f32 reference matching the PyTorch module."""
    (w1, b1, w2, b2, w3g, w3s, b3, w4, b4, w5, b5, proj_ws, proj_bs) = params
    h = jax.nn.relu(points @ w1 + b1)
    geom = h @ w2 + b2
    h = jax.nn.relu(geom @ w3g + style_feat @ w3s + b3)
    h = jax.nn.relu(h @ w4 + b4)
    colors = jax.nn.sigmoid(h @ w5 + b5)
    projected = [(colors @ wk + bk)[:, None, :] for wk, bk in zip(proj_ws, proj_bs)]
    return colors, projected


if __name__ == "__main__":
    key = jax.random.PRNGKey(0)
    k_pts, k_sty, k_par = jax.random.split(key, 3)

    N = 64                      # number of points (arbitrary N supported)
    style_dim = 32              # style_dims = (32,)
    color_proj_dims = [16, 8]   # two projectors

    points = jax.random.normal(k_pts, (N, 3), jnp.float32)
    style_feat = jax.random.normal(k_sty, (N, style_dim), jnp.float32)
    params = init_params(k_par, style_dim, color_proj_dims)

    colors, projected = point_cloud_style_transfer_lite(
        points, style_feat, params, color_proj_dims, tile_n=2048)

    colors = jax.block_until_ready(colors)
    projected = [jax.block_until_ready(p) for p in projected]

    # Shape / range sanity.
    assert colors.shape == (N, 3)
    assert projected[0].shape == (N, 1, 16)
    assert projected[1].shape == (N, 1, 8)
    assert bool(jnp.all(jnp.isfinite(colors)))
    assert bool(jnp.all((colors >= 0.0) & (colors <= 1.0)))   # sigmoid range

    # Numerical check vs. f32 reference (bf16 matmul operands -> loose tol).
    ref_colors, ref_proj = reference_forward(points, style_feat, params,
                                             color_proj_dims)
    assert bool(jnp.allclose(colors, ref_colors, atol=5e-2, rtol=5e-2))
    for p, rp in zip(projected, ref_proj):
        assert bool(jnp.allclose(p, rp, atol=5e-2, rtol=5e-2))

    print("KERNEL_OK")
</pallas_src>

<mosaic_0001>
module attributes {stable_mosaic.version = 11 : i64} {
  func.func @_kernel(%arg0: i32, %arg1: memref<64x3xf32, #tpu.memory_space<vmem>>, %arg2: memref<64x32xf32, #tpu.memory_space<vmem>>, %arg3: memref<3x64xf32, #tpu.memory_space<vmem>>, %arg4: memref<1x64xf32, #tpu.memory_space<vmem>>, %arg5: memref<64x64xbf16, #tpu.memory_space<vmem>>, %arg6: memref<1x64xf32, #tpu.memory_space<vmem>>, %arg7: memref<64x256xbf16, #tpu.memory_space<vmem>>, %arg8: memref<32x256xbf16, #tpu.memory_space<vmem>>, %arg9: memref<1x256xf32, #tpu.memory_space<vmem>>, %arg10: memref<256x128xbf16, #tpu.memory_space<vmem>>, %arg11: memref<1x128xf32, #tpu.memory_space<vmem>>, %arg12: memref<3x128xf32, #tpu.memory_space<vmem>>, %arg13: memref<1x3xf32, #tpu.memory_space<vmem>>, %arg14: memref<3x32xf32, #tpu.memory_space<vmem>>, %arg15: memref<1x32xf32, #tpu.memory_space<vmem>>, %arg16: memref<64x32xf32, #tpu.memory_space<vmem>>) attributes {dimension_semantics = [#tpu.dimension_semantics<parallel>], iteration_bounds = array<i64: 1>, scalar_prefetch = 0 : i64, scratch_operands = 0 : i64, tpu.core_type = #tpu.core_type<tc>, window_params = [{transform_indices = @transform_0, window_bounds = array<i64: 64, 3>}, {transform_indices = @transform_1, window_bounds = array<i64: 64, 32>}, {pipeline_mode = #tpu.pipeline_mode<synchronous>, transform_indices = @transform_2, window_bounds = array<i64: 3, 64>}, {pipeline_mode = #tpu.pipeline_mode<synchronous>, transform_indices = @transform_3, window_bounds = array<i64: 1, 64>}, {pipeline_mode = #tpu.pipeline_mode<synchronous>, transform_indices = @transform_4, window_bounds = array<i64: 64, 64>}, {pipeline_mode = #tpu.pipeline_mode<synchronous>, transform_indices = @transform_5, window_bounds = array<i64: 1, 64>}, {pipeline_mode = #tpu.pipeline_mode<synchronous>, transform_indices = @transform_6, window_bounds = array<i64: 64, 256>}, {pipeline_mode = #tpu.pipeline_mode<synchronous>, transform_indices = @transform_7, window_bounds = array<i64: 32, 256>}, {pipeline_mode = #tpu.pipeline_mode<synchronous>, transform_indices = @transform_8, window_bounds = array<i64: 1, 256>}, {pipeline_mode = #tpu.pipeline_mode<synchronous>, transform_indices = @transform_9, window_bounds = array<i64: 256, 128>}, {pipeline_mode = #tpu.pipeline_mode<synchronous>, transform_indices = @transform_10, window_bounds = array<i64: 1, 128>}, {pipeline_mode = #tpu.pipeline_mode<synchronous>, transform_indices = @transform_11, window_bounds = array<i64: 3, 128>}, {pipeline_mode = #tpu.pipeline_mode<synchronous>, transform_indices = @transform_12, window_bounds = array<i64: 1, 3>}, {pipeline_mode = #tpu.pipeline_mode<synchronous>, transform_indices = @transform_13, window_bounds = array<i64: 3, 32>}, {pipeline_mode = #tpu.pipeline_mode<synchronous>, transform_indices = @transform_14, window_bounds = array<i64: 1, 32>}, {transform_indices = @transform_15, window_bounds = array<i64: 64, 32>}]} {
    %c0 = arith.constant 0 : index
    %c0_0 = arith.constant 0 : index
    %0 = vector.load %arg1[%c0, %c0_0] : memref<64x3xf32, #tpu.memory_space<vmem>>, vector<64x3xf32>
    %c0_1 = arith.constant 0 : index
    %c0_2 = arith.constant 0 : index
    %1 = vector.load %arg2[%c0_1, %c0_2] : memref<64x32xf32, #tpu.memory_space<vmem>>, vector<64x32xf32>
    %2 = arith.truncf %1 : vector<64x32xf32> to vector<64x32xbf16>
    %c0_3 = arith.constant 0 : index
    %c0_4 = arith.constant 0 : index
    %3 = vector.load %arg3[%c0_3, %c0_4] : memref<3x64xf32, #tpu.memory_space<vmem>>, vector<3x64xf32>
    %4 = vector.extract_strided_slice %0 {offsets = [0, 0], sizes = [64, 1], strides = [1, 1]} : vector<64x3xf32> to vector<64x1xf32>
    %5 = vector.extract_strided_slice %3 {offsets = [0, 0], sizes = [1, 64], strides = [1, 1]} : vector<3x64xf32> to vector<1x64xf32>
    %6 = vector.broadcast %4 : vector<64x1xf32> to vector<64x64xf32>
    %7 = vector.broadcast %5 : vector<1x64xf32> to vector<64x64xf32>
    %8 = arith.mulf %6, %7 : vector<64x64xf32>
    %9 = vector.extract_strided_slice %0 {offsets = [0, 1], sizes = [64, 1], strides = [1, 1]} : vector<64x3xf32> to vector<64x1xf32>
    %10 = vector.extract_strided_slice %3 {offsets = [1, 0], sizes = [1, 64], strides = [1, 1]} : vector<3x64xf32> to vector<1x64xf32>
    %11 = vector.broadcast %9 : vector<64x1xf32> to vector<64x64xf32>
    %12 = vector.broadcast %10 : vector<1x64xf32> to vector<64x64xf32>
    %13 = arith.mulf %11, %12 : vector<64x64xf32>
    %14 = arith.addf %8, %13 : vector<64x64xf32>
    %15 = vector.extract_strided_slice %0 {offsets = [0, 2], sizes = [64, 1], strides = [1, 1]} : vector<64x3xf32> to vector<64x1xf32>
    %16 = vector.extract_strided_slice %3 {offsets = [2, 0], sizes = [1, 64], strides = [1, 1]} : vector<3x64xf32> to vector<1x64xf32>
    %17 = vector.broadcast %15 : vector<64x1xf32> to vector<64x64xf32>
    %18 = vector.broadcast %16 : vector<1x64xf32> to vector<64x64xf32>
    %19 = arith.mulf %17, %18 : vector<64x64xf32>
    %20 = arith.addf %14, %19 : vector<64x64xf32>
    %c0_5 = arith.constant 0 : index
    %c0_6 = arith.constant 0 : index
    %21 = vector.load %arg4[%c0_5, %c0_6] : memref<1x64xf32, #tpu.memory_space<vmem>>, vector<1x64xf32>
    %22 = vector.broadcast %21 : vector<1x64xf32> to vector<64x64xf32>
    %23 = arith.addf %20, %22 : vector<64x64xf32>
    %cst = arith.constant 0.000000e+00 : f32
    %24 = vector.broadcast %cst : f32 to vector<64x64xf32>
    %25 = arith.maximumf %23, %24 : vector<64x64xf32>
    %26 = arith.truncf %25 : vector<64x64xf32> to vector<64x64xbf16>
    %c0_7 = arith.constant 0 : index
    %c0_8 = arith.constant 0 : index
    %27 = vector.load %arg5[%c0_7, %c0_8] : memref<64x64xbf16, #tpu.memory_space<vmem>>, vector<64x64xbf16>
    %cst_9 = arith.constant dense<0.000000e+00> : vector<64x64xf32>
    %28 = tpu.matmul %26, %27, %cst_9 {dimension_numbers = #tpu.dot_dimension_numbers<[1], [0], [0], [1], [0, 0, 1, 1], [], []>} : vector<64x64xbf16>, vector<64x64xbf16>, vector<64x64xf32> -> vector<64x64xf32>
    %c0_10 = arith.constant 0 : index
    %c0_11 = arith.constant 0 : index
    %29 = vector.load %arg6[%c0_10, %c0_11] : memref<1x64xf32, #tpu.memory_space<vmem>>, vector<1x64xf32>
    %30 = vector.broadcast %29 : vector<1x64xf32> to vector<64x64xf32>
    %31 = arith.addf %28, %30 : vector<64x64xf32>
    %32 = arith.truncf %31 : vector<64x64xf32> to vector<64x64xbf16>
    %c0_12 = arith.constant 0 : index
    %c0_13 = arith.constant 0 : index
    %33 = vector.load %arg7[%c0_12, %c0_13] : memref<64x256xbf16, #tpu.memory_space<vmem>>, vector<64x256xbf16>
    %cst_14 = arith.constant dense<0.000000e+00> : vector<64x256xf32>
    %34 = tpu.matmul %32, %33, %cst_14 {dimension_numbers = #tpu.dot_dimension_numbers<[1], [0], [0], [1], [0, 0, 1, 1], [], []>} : vector<64x64xbf16>, vector<64x256xbf16>, vector<64x256xf32> -> vector<64x256xf32>
    %c0_15 = arith.constant 0 : index
    %c0_16 = arith.constant 0 : index
    %35 = vector.load %arg8[%c0_15, %c0_16] : memref<32x256xbf16, #tpu.memory_space<vmem>>, vector<32x256xbf16>
    %cst_17 = arith.constant dense<0.000000e+00> : vector<64x256xf32>
    %36 = tpu.matmul %2, %35, %cst_17 {dimension_numbers = #tpu.dot_dimension_numbers<[1], [0], [0], [1], [0, 0, 1, 1], [], []>} : vector<64x32xbf16>, vector<32x256xbf16>, vector<64x256xf32> -> vector<64x256xf32>
    %37 = arith.addf %34, %36 : vector<64x256xf32>
    %c0_18 = arith.constant 0 : index
    %c0_19 = arith.constant 0 : index
    %38 = vector.load %arg9[%c0_18, %c0_19] : memref<1x256xf32, #tpu.memory_space<vmem>>, vector<1x256xf32>
    %39 = vector.broadcast %38 : vector<1x256xf32> to vector<64x256xf32>
    %40 = arith.addf %37, %39 : vector<64x256xf32>
    %cst_20 = arith.constant 0.000000e+00 : f32
    %41 = vector.broadcast %cst_20 : f32 to vector<64x256xf32>
    %42 = arith.maximumf %40, %41 : vector<64x256xf32>
    %43 = arith.truncf %42 : vector<64x256xf32> to vector<64x256xbf16>
    %c0_21 = arith.constant 0 : index
    %c0_22 = arith.constant 0 : index
    %44 = vector.load %arg10[%c0_21, %c0_22] : memref<256x128xbf16, #tpu.memory_space<vmem>>, vector<256x128xbf16>
    %cst_23 = arith.constant dense<0.000000e+00> : vector<64x128xf32>
    %45 = tpu.matmul %43, %44, %cst_23 {dimension_numbers = #tpu.dot_dimension_numbers<[1], [0], [0], [1], [0, 0, 1, 1], [], []>} : vector<64x256xbf16>, vector<256x128xbf16>, vector<64x128xf32> -> vector<64x128xf32>
    %c0_24 = arith.constant 0 : index
    %c0_25 = arith.constant 0 : index
    %46 = vector.load %arg11[%c0_24, %c0_25] : memref<1x128xf32, #tpu.memory_space<vmem>>, vector<1x128xf32>
    %47 = vector.broadcast %46 : vector<1x128xf32> to vector<64x128xf32>
    %48 = arith.addf %45, %47 : vector<64x128xf32>
    %cst_26 = arith.constant 0.000000e+00 : f32
    %49 = vector.broadcast %cst_26 : f32 to vector<64x128xf32>
    %50 = arith.maximumf %48, %49 : vector<64x128xf32>
    %c0_27 = arith.constant 0 : index
    %c0_28 = arith.constant 0 : index
    %51 = vector.load %arg12[%c0_27, %c0_28] : memref<3x128xf32, #tpu.memory_space<vmem>>, vector<3x128xf32>
    %c0_29 = arith.constant 0 : index
    %c0_30 = arith.constant 0 : index
    %52 = vector.load %arg13[%c0_29, %c0_30] : memref<1x3xf32, #tpu.memory_space<vmem>>, vector<1x3xf32>
    %53 = vector.extract_strided_slice %51 {offsets = [0, 0], sizes = [1, 128], strides = [1, 1]} : vector<3x128xf32> to vector<1x128xf32>
    %54 = vector.broadcast %53 : vector<1x128xf32> to vector<64x128xf32>
    %55 = arith.mulf %50, %54 : vector<64x128xf32>
    %cst_31 = arith.constant dense<0.000000e+00> : vector<64xf32>
    %56 = vector.multi_reduction <add>, %55, %cst_31 [1] : vector<64x128xf32> to vector<64xf32>
    %57 = vector.shape_cast %56 : vector<64xf32> to vector<64x1xf32>
    %58 = vector.extract_strided_slice %52 {offsets = [0, 0], sizes = [1, 1], strides = [1, 1]} : vector<1x3xf32> to vector<1x1xf32>
    %59 = vector.broadcast %58 : vector<1x1xf32> to vector<64x1xf32>
    %60 = arith.addf %57, %59 : vector<64x1xf32>
    %61 = arith.negf %60 : vector<64x1xf32>
    %62 = math.exp %61 : vector<64x1xf32>
    %cst_32 = arith.constant 1.000000e+00 : f32
    %63 = vector.broadcast %cst_32 : f32 to vector<64x1xf32>
    %64 = arith.addf %63, %62 : vector<64x1xf32>
    %65 = arith.divf %63, %64 : vector<64x1xf32>
    %66 = vector.extract_strided_slice %51 {offsets = [1, 0], sizes = [1, 128], strides = [1, 1]} : vector<3x128xf32> to vector<1x128xf32>
    %67 = vector.broadcast %66 : vector<1x128xf32> to vector<64x128xf32>
    %68 = arith.mulf %50, %67 : vector<64x128xf32>
    %cst_33 = arith.constant dense<0.000000e+00> : vector<64xf32>
    %69 = vector.multi_reduction <add>, %68, %cst_33 [1] : vector<64x128xf32> to vector<64xf32>
    %70 = vector.shape_cast %69 : vector<64xf32> to vector<64x1xf32>
    %71 = vector.extract_strided_slice %52 {offsets = [0, 1], sizes = [1, 1], strides = [1, 1]} : vector<1x3xf32> to vector<1x1xf32>
    %72 = vector.broadcast %71 : vector<1x1xf32> to vector<64x1xf32>
    %73 = arith.addf %70, %72 : vector<64x1xf32>
    %74 = arith.negf %73 : vector<64x1xf32>
    %75 = math.exp %74 : vector<64x1xf32>
    %cst_34 = arith.constant 1.000000e+00 : f32
    %76 = vector.broadcast %cst_34 : f32 to vector<64x1xf32>
    %77 = arith.addf %76, %75 : vector<64x1xf32>
    %78 = arith.divf %76, %77 : vector<64x1xf32>
    %79 = vector.extract_strided_slice %51 {offsets = [2, 0], sizes = [1, 128], strides = [1, 1]} : vector<3x128xf32> to vector<1x128xf32>
    %80 = vector.broadcast %79 : vector<1x128xf32> to vector<64x128xf32>
    %81 = arith.mulf %50, %80 : vector<64x128xf32>
    %cst_35 = arith.constant dense<0.000000e+00> : vector<64xf32>
    %82 = vector.multi_reduction <add>, %81, %cst_35 [1] : vector<64x128xf32> to vector<64xf32>
    %83 = vector.shape_cast %82 : vector<64xf32> to vector<64x1xf32>
    %84 = vector.extract_strided_slice %52 {offsets = [0, 2], sizes = [1, 1], strides = [1, 1]} : vector<1x3xf32> to vector<1x1xf32>
    %85 = vector.broadcast %84 : vector<1x1xf32> to vector<64x1xf32>
    %86 = arith.addf %83, %85 : vector<64x1xf32>
    %87 = arith.negf %86 : vector<64x1xf32>
    %88 = math.exp %87 : vector<64x1xf32>
    %cst_36 = arith.constant 1.000000e+00 : f32
    %89 = vector.broadcast %cst_36 : f32 to vector<64x1xf32>
    %90 = arith.addf %89, %88 : vector<64x1xf32>
    %91 = arith.divf %89, %90 : vector<64x1xf32>
    %c0_37 = arith.constant 0 : index
    %c0_38 = arith.constant 0 : index
    %92 = vector.load %arg14[%c0_37, %c0_38] : memref<3x32xf32, #tpu.memory_space<vmem>>, vector<3x32xf32>
    %93 = vector.extract_strided_slice %92 {offsets = [0, 0], sizes = [1, 32], strides = [1, 1]} : vector<3x32xf32> to vector<1x32xf32>
    %94 = vector.broadcast %65 : vector<64x1xf32> to vector<64x32xf32>
    %95 = vector.broadcast %93 : vector<1x32xf32> to vector<64x32xf32>
    %96 = arith.mulf %94, %95 : vector<64x32xf32>
    %97 = vector.extract_strided_slice %92 {offsets = [1, 0], sizes = [1, 32], strides = [1, 1]} : vector<3x32xf32> to vector<1x32xf32>
    %98 = vector.broadcast %78 : vector<64x1xf32> to vector<64x32xf32>
    %99 = vector.broadcast %97 : vector<1x32xf32> to vector<64x32xf32>
    %100 = arith.mulf %98, %99 : vector<64x32xf32>
    %101 = arith.addf %96, %100 : vector<64x32xf32>
    %102 = vector.extract_strided_slice %92 {offsets = [2, 0], sizes = [1, 32], strides = [1, 1]} : vector<3x32xf32> to vector<1x32xf32>
    %103 = vector.broadcast %91 : vector<64x1xf32> to vector<64x32xf32>
    %104 = vector.broadcast %102 : vector<1x32xf32> to vector<64x32xf32>
    %105 = arith.mulf %103, %104 : vector<64x32xf32>
    %106 = arith.addf %101, %105 : vector<64x32xf32>
    %c0_39 = arith.constant 0 : index
    %c0_40 = arith.constant 0 : index
    %107 = vector.load %arg15[%c0_39, %c0_40] : memref<1x32xf32, #tpu.memory_space<vmem>>, vector<1x32xf32>
    %108 = vector.broadcast %107 : vector<1x32xf32> to vector<64x32xf32>
    %109 = arith.addf %106, %108 : vector<64x32xf32>
    %c0_41 = arith.constant 0 : index
    %c0_42 = arith.constant 0 : index
    %110 = vector.load %arg16[%c0_41, %c0_42] : memref<64x32xf32, #tpu.memory_space<vmem>>, vector<64x32xf32>
    tpu.vector_store %arg16[%c0_41, %c0_42], %109 {strides = array<i32>} : memref<64x32xf32, #tpu.memory_space<vmem>>, vector<64x32xf32>,
    return
  }
  func.func @transform_0(%arg0: i32) -> (i32, i32) {
    %c0_i32 = arith.constant 0 : i32
    %c0_i32_0 = arith.constant 0 : i32
    return %arg0, %c0_i32 : i32, i32
  }
  func.func @transform_1(%arg0: i32) -> (i32, i32) {
    %c0_i32 = arith.constant 0 : i32
    %c0_i32_0 = arith.constant 0 : i32
    return %arg0, %c0_i32 : i32, i32
  }
  func.func @transform_2(%arg0: i32) -> (i32, i32) {
    %c0_i32 = arith.constant 0 : i32
    %c0_i32_0 = arith.constant 0 : i32
    %c0_i32_1 = arith.constant 0 : i32
    return %c0_i32, %c0_i32_0 : i32, i32
  }
  func.func @transform_3(%arg0: i32) -> (i32, i32) {
    %c0_i32 = arith.constant 0 : i32
    %c0_i32_0 = arith.constant 0 : i32
    %c0_i32_1 = arith.constant 0 : i32
    return %c0_i32, %c0_i32_0 : i32, i32
  }
  func.func @transform_4(%arg0: i32) -> (i32, i32) {
    %c0_i32 = arith.constant 0 : i32
    %c0_i32_0 = arith.constant 0 : i32
    %c0_i32_1 = arith.constant 0 : i32
    return %c0_i32, %c0_i32_0 : i32, i32
  }
  func.func @transform_5(%arg0: i32) -> (i32, i32) {
    %c0_i32 = arith.constant 0 : i32
    %c0_i32_0 = arith.constant 0 : i32
    %c0_i32_1 = arith.constant 0 : i32
    return %c0_i32, %c0_i32_0 : i32, i32
  }
  func.func @transform_6(%arg0: i32) -> (i32, i32) {
    %c0_i32 = arith.constant 0 : i32
    %c0_i32_0 = arith.constant 0 : i32
    %c0_i32_1 = arith.constant 0 : i32
    return %c0_i32, %c0_i32_0 : i32, i32
  }
  func.func @transform_7(%arg0: i32) -> (i32, i32) {
    %c0_i32 = arith.constant 0 : i32
    %c0_i32_0 = arith.constant 0 : i32
    %c0_i32_1 = arith.constant 0 : i32
    return %c0_i32, %c0_i32_0 : i32, i32
  }
  func.func @transform_8(%arg0: i32) -> (i32, i32) {
    %c0_i32 = arith.constant 0 : i32
    %c0_i32_0 = arith.constant 0 : i32
    %c0_i32_1 = arith.constant 0 : i32
    return %c0_i32, %c0_i32_0 : i32, i32
  }
  func.func @transform_9(%arg0: i32) -> (i32, i32) {
    %c0_i32 = arith.constant 0 : i32
    %c0_i32_0 = arith.constant 0 : i32
    %c0_i32_1 = arith.constant 0 : i32
    return %c0_i32, %c0_i32_0 : i32, i32
  }
  func.func @transform_10(%arg0: i32) -> (i32, i32) {
    %c0_i32 = arith.constant 0 : i32
    %c0_i32_0 = arith.constant 0 : i32
    %c0_i32_1 = arith.constant 0 : i32
    return %c0_i32, %c0_i32_0 : i32, i32
  }
  func.func @transform_11(%arg0: i32) -> (i32, i32) {
    %c0_i32 = arith.constant 0 : i32
    %c0_i32_0 = arith.constant 0 : i32
    %c0_i32_1 = arith.constant 0 : i32
    return %c0_i32, %c0_i32_0 : i32, i32
  }
  func.func @transform_12(%arg0: i32) -> (i32, i32) {
    %c0_i32 = arith.constant 0 : i32
    %c0_i32_0 = arith.constant 0 : i32
    %c0_i32_1 = arith.constant 0 : i32
    return %c0_i32, %c0_i32_0 : i32, i32
  }
  func.func @transform_13(%arg0: i32) -> (i32, i32) {
    %c0_i32 = arith.constant 0 : i32
    %c0_i32_0 = arith.constant 0 : i32
    %c0_i32_1 = arith.constant 0 : i32
    return %c0_i32, %c0_i32_0 : i32, i32
  }
  func.func @transform_14(%arg0: i32) -> (i32, i32) {
    %c0_i32 = arith.constant 0 : i32
    %c0_i32_0 = arith.constant 0 : i32
    %c0_i32_1 = arith.constant 0 : i32
    return %c0_i32, %c0_i32_0 : i32, i32
  }
  func.func @transform_15(%arg0: i32) -> (i32, i32) {
    %c0_i32 = arith.constant 0 : i32
    %c0_i32_0 = arith.constant 0 : i32
    return %arg0, %c0_i32 : i32, i32
  }
}

</mosaic_0001>

<llo_original>
// kernel: tpu_custom_call.1
$region0: #{tpu_custom_call.1}
  #allocation0 [shape = 'u32[]', space=smem, size = 0x4, offset = 0x4, fixed_abs, tag = 'smem constant byte address 0x4 - core index']
  #allocation1 [shape = 'u32[144,128]{1,0:T(1,128)}', space=vmem, size = 0x12000, scoped, tag = 'internal scratch']
  %s0 = inlined_call_operand.vmem [shape: f32[64,3], index: 0, kind: input, shape index: {}]
  %s1 = inlined_call_operand.vmem [shape: f32[64,32], index: 1, kind: input, shape index: {}]
  %s2 = inlined_call_operand.vmem [shape: f32[3,64], index: 2, kind: input, shape index: {}]
  %s3 = inlined_call_operand.vmem [shape: f32[1,64], index: 3, kind: input, shape index: {}]
  %s4 = inlined_call_operand.hbm [shape: bf16[64,64], index: 4, kind: input, shape index: {}]
  %s5 = inlined_call_operand.hbm [shape: f32[1,64], index: 5, kind: input, shape index: {}]
  %s6 = inlined_call_operand.vmem [shape: bf16[64,256], index: 6, kind: input, shape index: {}]
  %s7 = inlined_call_operand.hbm [shape: bf16[32,256], index: 7, kind: input, shape index: {}]
  %s8 = inlined_call_operand.hbm [shape: f32[1,256], index: 8, kind: input, shape index: {}]
  %s9 = inlined_call_operand.vmem [shape: bf16[256,128], index: 9, kind: input, shape index: {}]
  %s10 = inlined_call_operand.hbm [shape: f32[1,128], index: 10, kind: input, shape index: {}]
  %s11 = inlined_call_operand.vmem [shape: f32[3,128], index: 11, kind: input, shape index: {}]
  %s12 = inlined_call_operand.vmem [shape: f32[1,3], index: 12, kind: input, shape index: {}]
  %s13 = inlined_call_operand.vmem [shape: f32[3,32], index: 13, kind: input, shape index: {}]
  %s14 = inlined_call_operand.vmem [shape: f32[1,32], index: 14, kind: input, shape index: {}]
  %s15 = inlined_call_operand.vmem [shape: f32[64,32], index: 15, kind: output, shape index: {}]
  %s16 = sld [smem:[#allocation0]]
  $region90: #{tpu_custom_call.1} parent=0
    _
  %s18 = ssub.s32 1, %s16
  %s19 = scalar_select 0, %s18, %s16
  $region1: #{tpu_custom_call.1} parent=0
    #allocation2 [shape = 'u8[16384]{0}', space=vmem, size = 0x4000, scoped, tag = 'input window, operand 4, single buffered']
    #allocation3 [shape = 's32[1]{0}', space=sflag, size = 0x4, scoped, tag = 'scoped memory for tpu_custom_call.1']
    #allocation4 [shape = 'u8[512]{0}', space=vmem, size = 0x400, scoped, tag = 'input window, operand 5, single buffered']
    #allocation5 [shape = 's32[1]{0}', space=sflag, size = 0x4, scoped, tag = 'scoped memory for tpu_custom_call.1']
    #allocation6 [shape = 'u8[16384]{0}', space=vmem, size = 0x4000, scoped, tag = 'input window, operand 7, single buffered']
    #allocation7 [shape = 'u8[1024]{0}', space=vmem, size = 0x400, scoped, tag = 'input window, operand 8, single buffered']
    #allocation8 [shape = 's32[1]{0}', space=sflag, size = 0x4, scoped, tag = 'scoped memory for tpu_custom_call.1']
    #allocation9 [shape = 'u8[512]{0}', space=vmem, size = 0x400, scoped, tag = 'input window, operand 10, single buffered']
    %20 = vsyncpa [#allocation3], 0
    %21 = vsyncpa [#allocation5], 0
    %22 = vsyncpa [#allocation8], 0
    // Predicated region
    $region2: #{tpu_custom_call.1} parent=1 // pred_check
      _
    $region3: #{tpu_custom_call.1} parent=1 // pred_check_branch
      %24 = sbr.rel (0) target = $region5
    $region4: #{tpu_custom_call.1} parent=1 // pred_region
      _
    $region5: #{tpu_custom_call.1} parent=1 // pred_fallthru
      _
    // Predicated region
    $region6: #{tpu_custom_call.1} parent=1 // pred_check
      _
    $region7: #{tpu_custom_call.1} parent=1 // pred_check_branch
      %26 = sbr.rel (0) target = $region9
    $region8: #{tpu_custom_call.1} parent=1 // pred_region
      _
    $region9: #{tpu_custom_call.1} parent=1 // pred_fallthru
      _
    // Predicated region
    $region10: #{tpu_custom_call.1} parent=1 // pred_check
      _
    $region11: #{tpu_custom_call.1} parent=1 // pred_check_branch
      %28 = sbr.rel (0) target = $region13
    $region12: #{tpu_custom_call.1} parent=1 // pred_region
      _
    $region13: #{tpu_custom_call.1} parent=1 // pred_fallthru
      _
    // Predicated region
    $region14: #{tpu_custom_call.1} parent=1 // pred_check
      _
    $region15: #{tpu_custom_call.1} parent=1 // pred_check_branch
      %30 = sbr.rel (0) target = $region17
    $region16: #{tpu_custom_call.1} parent=1 // pred_region
      _
    $region17: #{tpu_custom_call.1} parent=1 // pred_fallthru
      _
    // Predicated region
    $region18: #{tpu_custom_call.1} parent=1 // pred_check
      _
    $region19: #{tpu_custom_call.1} parent=1 // pred_check_branch
      %32 = sbr.rel (0) target = $region21
    $region20: #{tpu_custom_call.1} parent=1 // pred_region
      %s34 = ssub.s32 512, 512
      %35 = vsyncadd [#allocation3], %s34
      %s36 = sshll.u32 [#allocation2], 4
      %s37 = int_to_ptr.vmem [resolvable:$true] %s36
      %42 = dma.hbm_to_vmem [thread:$0]  %s4, 512, %s37, [#allocation3], 64, 64, 4
    $region21: #{tpu_custom_call.1} parent=1 // pred_fallthru
      _
    // Predicated region
    $region22: #{tpu_custom_call.1} parent=1 // pred_check
      _
    $region23: #{tpu_custom_call.1} parent=1 // pred_check_branch
      %44 = sbr.rel (0) target = $region25
    $region24: #{tpu_custom_call.1} parent=1 // pred_region
      %s46 = ssub.s32 16, 16
      %47 = vsyncadd [#allocation5], %s46
      %s49 = sshll.u32 [#allocation4], 4
      %s50 = int_to_ptr.vmem [resolvable:$true] %s49
      %52 = dma.hbm_to_vmem [thread:$0]  %s5, 16, %s50, [#allocation5]
    $region25: #{tpu_custom_call.1} parent=1 // pred_fallthru
      _
    // Predicated region
    $region26: #{tpu_custom_call.1} parent=1 // pred_check
      _
    $region27: #{tpu_custom_call.1} parent=1 // pred_check_branch
      %54 = sbr.rel (0) target = $region29
    $region28: #{tpu_custom_call.1} parent=1 // pred_region
      _
    $region29: #{tpu_custom_call.1} parent=1 // pred_fallthru
      _
    // Predicated region
    $region30: #{tpu_custom_call.1} parent=1 // pred_check
      _
    $region31: #{tpu_custom_call.1} parent=1 // pred_check_branch
      %56 = sbr.rel (0) target = $region33
    $region32: #{tpu_custom_call.1} parent=1 // pred_region
      %s58 = ssub.s32 512, 512
      %59 = vsyncadd [#allocation5], %s58
      %s60 = sshll.u32 [#allocation6], 4
      %s61 = int_to_ptr.vmem [resolvable:$true] %s60
      %66 = dma.hbm_to_vmem [thread:$0]  %s7, 512, %s61, [#allocation5], 128, 128, 8
    $region33: #{tpu_custom_call.1} parent=1 // pred_fallthru
      _
    // Predicated region
    $region34: #{tpu_custom_call.1} parent=1 // pred_check
      _
    $region35: #{tpu_custom_call.1} parent=1 // pred_check_branch
      %68 = sbr.rel (0) target = $region37
    $region36: #{tpu_custom_call.1} parent=1 // pred_region
      %s70 = ssub.s32 32, 32
      %71 = vsyncadd [#allocation8], %s70
      %s73 = sshll.u32 [#allocation7], 4
      %s74 = int_to_ptr.vmem [resolvable:$true] %s73
      %76 = dma.hbm_to_vmem [thread:$0]  %s8, 32, %s74, [#allocation8]
    $region37: #{tpu_custom_call.1} parent=1 // pred_fallthru
      _
    // Predicated region
    $region38: #{tpu_custom_call.1} parent=1 // pred_check
      _
    $region39: #{tpu_custom_call.1} parent=1 // pred_check_branch
      %78 = sbr.rel (0) target = $region41
    $region40: #{tpu_custom_call.1} parent=1 // pred_region
      _
    $region41: #{tpu_custom_call.1} parent=1 // pred_fallthru
      _
    // Predicated region
    $region42: #{tpu_custom_call.1} parent=1 // pred_check
      _
    $region43: #{tpu_custom_call.1} parent=1 // pred_check_branch
      %80 = sbr.rel (0) target = $region45
    $region44: #{tpu_custom_call.1} parent=1 // pred_region
      %s82 = ssub.s32 16, 16
      %83 = vsyncadd [#allocation8], %s82
      %s85 = sshll.u32 [#allocation9], 4
      %s86 = int_to_ptr.vmem [resolvable:$true] %s85
      %88 = dma.hbm_to_vmem [thread:$0]  %s10, 16, %s86, [#allocation8]
    $region45: #{tpu_custom_call.1} parent=1 // pred_fallthru
      _
    // Predicated region
    $region46: #{tpu_custom_call.1} parent=1 // pred_check
      _
    $region47: #{tpu_custom_call.1} parent=1 // pred_check_branch
      %90 = sbr.rel (0) target = $region49
    $region48: #{tpu_custom_call.1} parent=1 // pred_region
      _
    $region49: #{tpu_custom_call.1} parent=1 // pred_fallthru
      _
    // Predicated region
    $region50: #{tpu_custom_call.1} parent=1 // pred_check
      _
    $region51: #{tpu_custom_call.1} parent=1 // pred_check_branch
      %92 = sbr.rel (0) target = $region53
    $region52: #{tpu_custom_call.1} parent=1 // pred_region
      _
    $region53: #{tpu_custom_call.1} parent=1 // pred_fallthru
      _
    // Predicated region
    $region54: #{tpu_custom_call.1} parent=1 // pred_check
      _
    $region55: #{tpu_custom_call.1} parent=1 // pred_check_branch
      %94 = sbr.rel (0) target = $region57
    $region56: #{tpu_custom_call.1} parent=1 // pred_region
      _
    $region57: #{tpu_custom_call.1} parent=1 // pred_fallthru
      _
    // Predicated region
    $region58: #{tpu_custom_call.1} parent=1 // pred_check
      _
    $region59: #{tpu_custom_call.1} parent=1 // pred_check_branch
      %96 = sbr.rel (0) target = $region61
    $region60: #{tpu_custom_call.1} parent=1 // pred_region
      _
    $region61: #{tpu_custom_call.1} parent=1 // pred_fallthru
      _
    // Predicated region
    $region62: #{tpu_custom_call.1} parent=1 // pred_check
      _
    $region63: #{tpu_custom_call.1} parent=1 // pred_check_branch
      %98 = sbr.rel (0) target = $region65
    $region64: #{tpu_custom_call.1} parent=1 // pred_region
      %99 = dma.done [#allocation3], 512
    $region65: #{tpu_custom_call.1} parent=1 // pred_fallthru
      _
    // Predicated region
    $region66: #{tpu_custom_call.1} parent=1 // pred_check
      _
    $region67: #{tpu_custom_call.1} parent=1 // pred_check_branch
      %101 = sbr.rel (0) target = $region69
    $region68: #{tpu_custom_call.1} parent=1 // pred_region
      %102 = dma.done [#allocation5], 16
    $region69: #{tpu_custom_call.1} parent=1 // pred_fallthru
      _
    // Predicated region
    $region70: #{tpu_custom_call.1} parent=1 // pred_check
      _
    $region71: #{tpu_custom_call.1} parent=1 // pred_check_branch
      %104 = sbr.rel (0) target = $region73
    $region72: #{tpu_custom_call.1} parent=1 // pred_region
      %105 = dma.done [#allocation5], 512
    $region73: #{tpu_custom_call.1} parent=1 // pred_fallthru
      _
    // Predicated region
    $region74: #{tpu_custom_call.1} parent=1 // pred_check
      _
    $region75: #{tpu_custom_call.1} parent=1 // pred_check_branch
      %107 = sbr.rel (0) target = $region77
    $region76: #{tpu_custom_call.1} parent=1 // pred_region
      %108 = dma.done [#allocation8], 32
    $region77: #{tpu_custom_call.1} parent=1 // pred_fallthru
      _
    // Predicated region
    $region78: #{tpu_custom_call.1} parent=1 // pred_check
      _
    $region79: #{tpu_custom_call.1} parent=1 // pred_check_branch
      %110 = sbr.rel (0) target = $region81
    $region80: #{tpu_custom_call.1} parent=1 // pred_region
      %111 = dma.done [#allocation8], 16
    $region81: #{tpu_custom_call.1} parent=1 // pred_fallthru
      _
    %v113 = vld [vmem:[%s0] sm:$0xff]
    %v114 = vld [vmem:[%s0 + $0x8] sm:$0xff]
    %v115 = vld [vmem:[%s0 + $0x10] sm:$0xff]
    %v116 = vld [vmem:[%s0 + $0x18] sm:$0xff]
    %v117 = vld [vmem:[%s0 + $0x20] sm:$0xff]
    %v118 = vld [vmem:[%s0 + $0x28] sm:$0xff]
    %v119 = vld [vmem:[%s0 + $0x30] sm:$0xff]
    %v120 = vld [vmem:[%s0 + $0x38] sm:$0xff]
    %v121 = vld [vmem:[%s1] sm:$0xff]
    %v122 = vld [vmem:[%s1 + $0x8] sm:$0xff]
    %v123 = vld [vmem:[%s1 + $0x10] sm:$0xff]
    %v124 = vld [vmem:[%s1 + $0x18] sm:$0xff]
    %v125 = vld [vmem:[%s1 + $0x20] sm:$0xff]
    %v126 = vld [vmem:[%s1 + $0x28] sm:$0xff]
    %v127 = vld [vmem:[%s1 + $0x30] sm:$0xff]
    %v128 = vld [vmem:[%s1 + $0x38] sm:$0xff]
    %v129 = vpack.c.bf16 %v122, %v121
    %v130 = vpack.c.bf16 %v124, %v123
    %v131 = vpack.c.bf16 %v126, %v125
    %v132 = vpack.c.bf16 %v128, %v127
    %v133 = vld [vmem:[%s2] sm:$0x7]
    %135 = vset.pattern.permute.xlu0 0
    %136 = vperm.xlu0 %135, %v113
    %v137 = vpop.permute.xlu0 %136
    %140 = vset.pattern.permute.xlu0 0
    %141 = vperm.xlu0 %140, %v114
    %v142 = vpop.permute.xlu0 %141
    %145 = vset.pattern.permute.xlu0 0
    %146 = vperm.xlu0 %145, %v115
    %v147 = vpop.permute.xlu0 %146
    %150 = vset.pattern.permute.xlu0 0
    %151 = vperm.xlu0 %150, %v116
    %v152 = vpop.permute.xlu0 %151
    %155 = vset.pattern.permute.xlu0 0
    %156 = vperm.xlu0 %155, %v117
    %v157 = vpop.permute.xlu0 %156
    %160 = vset.pattern.permute.xlu0 0
    %161 = vperm.xlu0 %160, %v118
    %v162 = vpop.permute.xlu0 %161
    %165 = vset.pattern.permute.xlu0 0
    %166 = vperm.xlu0 %165, %v119
    %v167 = vpop.permute.xlu0 %166
    %170 = vset.pattern.permute.xlu0 0
    %171 = vperm.xlu0 %170, %v120
    %v172 = vpop.permute.xlu0 %171
    %v174 = vlaneseq
    %v175 = vshrl.u32 %v174, 7
    %v176 = vsub.s32 0, %v175
    %v177 = vrot.slane %v133, %v176
    %v178 = vmul.f32 %v137, %v177
    %v179 = vmul.f32 %v142, %v177
    %v180 = vmul.f32 %v147, %v177
    %v181 = vmul.f32 %v152, %v177
    %v182 = vmul.f32 %v157, %v177
    %v183 = vmul.f32 %v162, %v177
    %v184 = vmul.f32 %v167, %v177
    %v185 = vmul.f32 %v172, %v177
    %186 = vset.pattern.permute.xlu0 1
    %187 = vperm.xlu0 %186, %v113
    %v188 = vpop.permute.xlu0 %187
    %190 = vset.pattern.permute.xlu0 1
    %191 = vperm.xlu0 %190, %v114
    %v192 = vpop.permute.xlu0 %191
    %194 = vset.pattern.permute.xlu0 1
    %195 = vperm.xlu0 %194, %v115
    %v196 = vpop.permute.xlu0 %195
    %198 = vset.pattern.permute.xlu0 1
    %199 = vperm.xlu0 %198, %v116
    %v200 = vpop.permute.xlu0 %199
    %202 = vset.pattern.permute.xlu0 1
    %203 = vperm.xlu0 %202, %v117
    %v204 = vpop.permute.xlu0 %203
    %206 = vset.pattern.permute.xlu0 1
    %207 = vperm.xlu0 %206, %v118
    %v208 = vpop.permute.xlu0 %207
    %210 = vset.pattern.permute.xlu0 1
    %211 = vperm.xlu0 %210, %v119
    %v212 = vpop.permute.xlu0 %211
    %214 = vset.pattern.permute.xlu0 1
    %215 = vperm.xlu0 %214, %v120
    %v216 = vpop.permute.xlu0 %215
    %v218 = vlaneseq
    %v219 = vshrl.u32 %v218, 7
    %v220 = vsub.s32 1, %v219
    %v221 = vrot.slane %v133, %v220
    %v222 = vmul.f32 %v188, %v221
    %v223 = vmul.f32 %v192, %v221
    %v224 = vmul.f32 %v196, %v221
    %v225 = vmul.f32 %v200, %v221
    %v226 = vmul.f32 %v204, %v221
    %v227 = vmul.f32 %v208, %v221
    %v228 = vmul.f32 %v212, %v221
    %v229 = vmul.f32 %v216, %v221
    %v230 = vadd.f32 %v178, %v222
    %v231 = vadd.f32 %v179, %v223
    %v232 = vadd.f32 %v180, %v224
    %v233 = vadd.f32 %v181, %v225
    %v234 = vadd.f32 %v182, %v226
    %v235 = vadd.f32 %v183, %v227
    %v236 = vadd.f32 %v184, %v228
    %v237 = vadd.f32 %v185, %v229
    %238 = vset.pattern.permute.xlu0 2
    %239 = vperm.xlu0 %238, %v113
    %v240 = vpop.permute.xlu0 %239
    %242 = vset.pattern.permute.xlu0 2
    %243 = vperm.xlu0 %242, %v114
    %v244 = vpop.permute.xlu0 %243
    %246 = vset.pattern.permute.xlu0 2
    %247 = vperm.xlu0 %246, %v115
    %v248 = vpop.permute.xlu0 %247
    %250 = vset.pattern.permute.xlu0 2
    %251 = vperm.xlu0 %250, %v116
    %v252 = vpop.permute.xlu0 %251
    %254 = vset.pattern.permute.xlu0 2
    %255 = vperm.xlu0 %254, %v117
    %v256 = vpop.permute.xlu0 %255
    %258 = vset.pattern.permute.xlu0 2
    %259 = vperm.xlu0 %258, %v118
    %v260 = vpop.permute.xlu0 %259
    %262 = vset.pattern.permute.xlu0 2
    %263 = vperm.xlu0 %262, %v119
    %v264 = vpop.permute.xlu0 %263
    %266 = vset.pattern.permute.xlu0 2
    %267 = vperm.xlu0 %266, %v120
    %v268 = vpop.permute.xlu0 %267
    %v270 = vlaneseq
    %v271 = vshrl.u32 %v270, 7
    %v272 = vsub.s32 2, %v271
    %v273 = vrot.slane %v133, %v272
    %v274 = vmul.f32 %v240, %v273
    %v275 = vmul.f32 %v244, %v273
    %v276 = vmul.f32 %v248, %v273
    %v277 = vmul.f32 %v252, %v273
    %v278 = vmul.f32 %v256, %v273
    %v279 = vmul.f32 %v260, %v273
    %v280 = vmul.f32 %v264, %v273
    %v281 = vmul.f32 %v268, %v273
    %v282 = vadd.f32 %v230, %v274
    %v283 = vadd.f32 %v231, %v275
    %v284 = vadd.f32 %v232, %v276
    %v285 = vadd.f32 %v233, %v277
    %v286 = vadd.f32 %v234, %v278
    %v287 = vadd.f32 %v235, %v279
    %v288 = vadd.f32 %v236, %v280
    %v289 = vadd.f32 %v237, %v281
    %v290 = vld [vmem:[%s3] sm:$0x1]
    %v292 = vlaneseq
    %v293 = vshrl.u32 %v292, 7
    %v294 = vsub.s32 0, %v293
    %v295 = vrot.slane %v290, %v294
    %v297 = vadd.f32 %v282, %v295
    %v298 = vadd.f32 %v283, %v295
    %v299 = vadd.f32 %v284, %v295
    %v300 = vadd.f32 %v285, %v295
    %v301 = vadd.f32 %v286, %v295
    %v302 = vadd.f32 %v287, %v295
    %v303 = vadd.f32 %v288, %v295
    %v304 = vadd.f32 %v289, %v295
    %v305 = vmax.f32 %v297, 0.0
    %v306 = vmax.f32 %v298, 0.0
    %v307 = vmax.f32 %v299, 0.0
    %v308 = vmax.f32 %v300, 0.0
    %v309 = vmax.f32 %v301, 0.0
    %v310 = vmax.f32 %v302, 0.0
    %v311 = vmax.f32 %v303, 0.0
    %v312 = vmax.f32 %v304, 0.0
    %v313 = vpack.c.bf16 %v306, %v305
    %v314 = vpack.c.bf16 %v308, %v307
    %v315 = vpack.c.bf16 %v310, %v309
    %v316 = vpack.c.bf16 %v312, %v311
    %v317 = vld [vmem:[#allocation2] sm:$0xf]
    %v318 = vld [vmem:[#allocation2 + $0x4] sm:$0xf]
    %v319 = vld [vmem:[#allocation2 + $0x8] sm:$0xf]
    %v320 = vld [vmem:[#allocation2 + $0xc] sm:$0xf]
    %v321 = vld [vmem:[#allocation2 + $0x10] sm:$0xf]
    %v322 = vld [vmem:[#allocation2 + $0x14] sm:$0xf]
    %v323 = vld [vmem:[#allocation2 + $0x18] sm:$0xf]
    %v324 = vld [vmem:[#allocation2 + $0x1c] sm:$0xf]
    %v325 = vld [vmem:[#allocation4] sm:$0x1]
    %v327 = vlaneseq
    %v328 = vshrl.u32 %v327, 7
    %v329 = vsub.s32 0, %v328
    %v330 = vrot.slane %v325, %v329
    %v340 = vunpack.c.l.b16 %v317
    %v341 = vunpack.c.l.b16 %v318
    %v342 = vunpack.c.l.b16 %v319
    %v343 = vunpack.c.l.b16 %v320
    %v344 = vunpack.c.l.b16 %v321
    %v345 = vunpack.c.l.b16 %v322
    %v346 = vunpack.c.l.b16 %v323
    %v347 = vunpack.c.l.b16 %v324
    %v348 = vpack.c.b16 %v341, %v340
    %v349 = vpack.c.b16 %v343, %v342
    %v350 = vpack.c.b16 %v345, %v344
    %v351 = vpack.c.b16 %v347, %v346
    %vm356 = vcmask 523264
    %v358 = vsel %vm356, %v313, 0
    %v361 = vsel %vm356, %v314, 0
    %v364 = vsel %vm356, %v315, 0
    %v367 = vsel %vm356, %v316, 0
    %369 = vmatprep.subr.bf16.mxu0 0
    %370 = vmatpush1.bf16.msra.mxu0 %v348
    %371 = vmatprep.subr.bf16.mxu0 0
    %372 = vmatpush1.bf16.msra.mxu0 %v349
    %373 = vmatprep.subr.bf16.mxu0 0
    %374 = vmatpush1.bf16.msra.mxu0 %v350
    %375 = vmatprep.subr.bf16.mxu0 0
    %376 = vmatpush1.bf16.msra.mxu0 %v351
    %377 = vmatprep.subr.bf16.mxu0 0
    %378 = vmatpush1.bf16.msra.mxu0 0
    %379 = vmatprep.subr.bf16.mxu0 0
    %380 = vmatpush1.bf16.msra.mxu0 0
    %381 = vmatprep.subr.bf16.mxu0 0
    %382 = vmatpush1.bf16.msra.mxu0 0
    %383 = vmatprep.subr.bf16.mxu0 0
    %384 = vmatpush1.bf16.msra.mxu0 0
    %385 = vmatprep.subr.bf16.mxu0 0
    %386 = vmatpush1.bf16.msra.mxu0 0
    %387 = vmatprep.subr.bf16.mxu0 0
    %388 = vmatpush1.bf16.msra.mxu0 0
    %389 = vmatprep.subr.bf16.mxu0 0
    %390 = vmatpush1.bf16.msra.mxu0 0
    %391 = vmatprep.subr.bf16.mxu0 0
    %392 = vmatpush1.bf16.msra.mxu0 0
    %393 = vmatprep.subr.bf16.mxu0 0
    %394 = vmatpush1.bf16.msra.mxu0 0
    %395 = vmatprep.subr.bf16.mxu0 0
    %396 = vmatpush1.bf16.msra.mxu0 0
    %397 = vmatprep.subr.bf16.mxu0 0
    %398 = vmatpush1.bf16.msra.mxu0 0
    %399 = vmatprep.subr.bf16.mxu0 0
    %400 = vmatpush1.bf16.msra.mxu0 0
    %401 = vmatprep.mubr.bf16.mxu0 0
    %402 = vmatmul.mubr.bf16.gmra.mrb[0].mxu0 %v358
    %v403 = vpop.f32.mrb[0].mxu0
    %v404 = vadd.f32 %v330, %v403
    %v405 = vpop.f32.mrb[0].mxu0
    %v406 = vpop.f32.mrb[0].mxu0
    %v407 = vadd.f32 %v330, %v406
    %v408 = vpop.f32.mrb[0].mxu0
    %409 = vmatprep.mubr.bf16.mxu0 0
    %410 = vmatmul.mubr.bf16.gmra.mrb[0].mxu0 %v361
    %v411 = vpop.f32.mrb[0].mxu0
    %v412 = vadd.f32 %v330, %v411
    %v413 = vpop.f32.mrb[0].mxu0
    %v414 = vpop.f32.mrb[0].mxu0
    %v415 = vadd.f32 %v330, %v414
    %v416 = vpop.f32.mrb[0].mxu0
    %417 = vmatprep.mubr.bf16.mxu0 0
    %418 = vmatmul.mubr.bf16.gmra.mrb[0].mxu0 %v364
    %v419 = vpop.f32.mrb[0].mxu0
    %v420 = vadd.f32 %v330, %v419
    %v421 = vpop.f32.mrb[0].mxu0
    %v422 = vpop.f32.mrb[0].mxu0
    %v423 = vadd.f32 %v330, %v422
    %v424 = vpop.f32.mrb[0].mxu0
    %425 = vmatprep.mubr.bf16.mxu0 0
    %426 = vmatmul.mubr.bf16.gmra.mrb[0].mxu0 %v367
    %v427 = vpop.f32.mrb[0].mxu0
    %v428 = vadd.f32 %v330, %v427
    %v429 = vpop.f32.mrb[0].mxu0
    %v430 = vpop.f32.mrb[0].mxu0
    %v431 = vadd.f32 %v330, %v430
    %v432 = vpop.f32.mrb[0].mxu0
    %433 = vdwg.mxu0
    %v434 = vpack.c.bf16 %v407, %v404
    %v435 = vpack.c.bf16 %v415, %v412
    %v436 = vpack.c.bf16 %v423, %v420
    %v437 = vpack.c.bf16 %v431, %v428
    %v438 = vld [vmem:[%s6] sm:$0xff]
    %v439 = vld [vmem:[%s6 + $0x8] sm:$0xff]
    %v440 = vld [vmem:[%s6 + $0x10] sm:$0xff]
    %v441 = vld [vmem:[%s6 + $0x18] sm:$0xff]
    %v442 = vld [vmem:[%s6 + $0x20] sm:$0xff]
    %v443 = vld [vmem:[%s6 + $0x28] sm:$0xff]
    %v444 = vld [vmem:[%s6 + $0x30] sm:$0xff]
    %v445 = vld [vmem:[%s6 + $0x38] sm:$0xff]
    %v446 = vld [vmem:[#allocation6] sm:$0xff]
    %v447 = vld [vmem:[#allocation6 + $0x8] sm:$0xff]
    %v448 = vld [vmem:[#allocation6 + $0x10] sm:$0xff]
    %v449 = vld [vmem:[#allocation6 + $0x18] sm:$0xff]
    %v454 = vunpack.c.l.b16 %v446
    %v455 = vunpack.c.h.b16 %v446
    %v456 = vunpack.c.l.b16 %v447
    %v457 = vunpack.c.h.b16 %v447
    %v458 = vunpack.c.l.b16 %v448
    %v459 = vunpack.c.h.b16 %v448
    %v460 = vunpack.c.l.b16 %v449
    %v461 = vunpack.c.h.b16 %v449
    %v462 = vpack.c.b16 %v456, %v454
    %v463 = vpack.c.b16 %v457, %v455
    %v464 = vpack.c.b16 %v460, %v458
    %v465 = vpack.c.b16 %v461, %v459
    %vm470 = vcmask 261120
    %v472 = vsel %vm470, %v129, 0
    %v475 = vsel %vm470, %v130, 0
    %v478 = vsel %vm470, %v131, 0
    %v481 = vsel %vm470, %v132, 0
    %483 = vmatprep.subr.bf16.mxu0 %v463
    %484 = vmatpush1.bf16.msra.mxu0 %v462
    %485 = vmatprep.subr.bf16.mxu0 %v465
    %486 = vmatpush1.bf16.msra.mxu0 %v464
    %487 = vmatprep.subr.bf16.mxu0 0
    %488 = vmatpush1.bf16.msra.mxu0 0
    %489 = vmatprep.subr.bf16.mxu0 0
    %490 = vmatpush1.bf16.msra.mxu0 0
    %491 = vmatprep.subr.bf16.mxu0 0
    %492 = vmatpush1.bf16.msra.mxu0 0
    %493 = vmatprep.subr.bf16.mxu0 0
    %494 = vmatpush1.bf16.msra.mxu0 0
    %495 = vmatprep.subr.bf16.mxu0 0
    %496 = vmatpush1.bf16.msra.mxu0 0
    %497 = vmatprep.subr.bf16.mxu0 0
    %498 = vmatpush1.bf16.msra.mxu0 0
    %499 = vmatprep.subr.bf16.mxu0 0
    %500 = vmatpush1.bf16.msra.mxu0 0
    %501 = vmatprep.subr.bf16.mxu0 0
    %502 = vmatpush1.bf16.msra.mxu0 0
    %503 = vmatprep.subr.bf16.mxu0 0
    %504 = vmatpush1.bf16.msra.mxu0 0
    %505 = vmatprep.subr.bf16.mxu0 0
    %506 = vmatpush1.bf16.msra.mxu0 0
    %507 = vmatprep.subr.bf16.mxu0 0
    %508 = vmatpush1.bf16.msra.mxu0 0
    %509 = vmatprep.subr.bf16.mxu0 0
    %510 = vmatpush1.bf16.msra.mxu0 0
    %511 = vmatprep.subr.bf16.mxu0 0
    %512 = vmatpush1.bf16.msra.mxu0 0
    %513 = vmatprep.subr.bf16.mxu0 0
    %514 = vmatpush1.bf16.msra.mxu0 0
    %515 = vmatprep.mubr.bf16.mxu0 0
    %516 = vmatmul.mubr.bf16.gmra.mrb[0].mxu0 %v472
    %v517 = vpop.f32.mrb[0].mxu0
    %v518 = vadd.f32 0.0, %v517
    %v519 = vpop.f32.mrb[0].mxu0
    %v520 = vadd.f32 0.0, %v519
    %v521 = vpop.f32.mrb[0].mxu0
    %v522 = vadd.f32 0.0, %v521
    %v523 = vpop.f32.mrb[0].mxu0
    %v524 = vadd.f32 0.0, %v523
    %525 = vmatprep.mubr.bf16.mxu0 0
    %526 = vmatmul.mubr.bf16.gmra.mrb[0].mxu0 %v475
    %v527 = vpop.f32.mrb[0].mxu0
    %v528 = vadd.f32 0.0, %v527
    %v529 = vpop.f32.mrb[0].mxu0
    %v530 = vadd.f32 0.0, %v529
    %v531 = vpop.f32.mrb[0].mxu0
    %v532 = vadd.f32 0.0, %v531
    %v533 = vpop.f32.mrb[0].mxu0
    %v534 = vadd.f32 0.0, %v533
    %535 = vmatprep.mubr.bf16.mxu0 0
    %536 = vmatmul.mubr.bf16.gmra.mrb[0].mxu0 %v478
    %v537 = vpop.f32.mrb[0].mxu0
    %v538 = vadd.f32 0.0, %v537
    %v539 = vpop.f32.mrb[0].mxu0
    %v540 = vadd.f32 0.0, %v539
    %v541 = vpop.f32.mrb[0].mxu0
    %v542 = vadd.f32 0.0, %v541
    %v543 = vpop.f32.mrb[0].mxu0
    %v544 = vadd.f32 0.0, %v543
    %545 = vmatprep.mubr.bf16.mxu0 0
    %546 = vmatmul.mubr.bf16.gmra.mrb[0].mxu0 %v481
    %v547 = vpop.f32.mrb[0].mxu0
    %v548 = vadd.f32 0.0, %v547
    %v549 = vpop.f32.mrb[0].mxu0
    %v550 = vadd.f32 0.0, %v549
    %v551 = vpop.f32.mrb[0].mxu0
    %v552 = vadd.f32 0.0, %v551
    %v553 = vpop.f32.mrb[0].mxu0
    %v554 = vadd.f32 0.0, %v553
    %555 = vdwg.mxu0
    %v564 = vunpack.c.l.b16 %v438
    %v565 = vunpack.c.h.b16 %v438
    %v566 = vunpack.c.l.b16 %v439
    %v567 = vunpack.c.h.b16 %v439
    %v568 = vunpack.c.l.b16 %v440
    %v569 = vunpack.c.h.b16 %v440
    %v570 = vunpack.c.l.b16 %v441
    %v571 = vunpack.c.h.b16 %v441
    %v572 = vunpack.c.l.b16 %v442
    %v573 = vunpack.c.h.b16 %v442
    %v574 = vunpack.c.l.b16 %v443
    %v575 = vunpack.c.h.b16 %v443
    %v576 = vunpack.c.l.b16 %v444
    %v577 = vunpack.c.h.b16 %v444
    %v578 = vunpack.c.l.b16 %v445
    %v579 = vunpack.c.h.b16 %v445
    %v580 = vpack.c.b16 %v566, %v564
    %v581 = vpack.c.b16 %v567, %v565
    %v582 = vpack.c.b16 %v570, %v568
    %v583 = vpack.c.b16 %v571, %v569
    %v584 = vpack.c.b16 %v574, %v572
    %v585 = vpack.c.b16 %v575, %v573
    %v586 = vpack.c.b16 %v578, %v576
    %v587 = vpack.c.b16 %v579, %v577
    %v597 = vsel %vm356, %v434, 0
    %v600 = vsel %vm356, %v435, 0
    %v603 = vsel %vm356, %v436, 0
    %v606 = vsel %vm356, %v437, 0
    %608 = vmatprep.subr.bf16.mxu0 %v581
    %609 = vmatpush1.bf16.msra.mxu0 %v580
    %610 = vmatprep.subr.bf16.mxu0 %v583
    %611 = vmatpush1.bf16.msra.mxu0 %v582
    %612 = vmatprep.subr.bf16.mxu0 %v585
    %613 = vmatpush1.bf16.msra.mxu0 %v584
    %614 = vmatprep.subr.bf16.mxu0 %v587
    %615 = vmatpush1.bf16.msra.mxu0 %v586
    %616 = vmatprep.subr.bf16.mxu0 0
    %617 = vmatpush1.bf16.msra.mxu0 0
    %618 = vmatprep.subr.bf16.mxu0 0
    %619 = vmatpush1.bf16.msra.mxu0 0
    %620 = vmatprep.subr.bf16.mxu0 0
    %621 = vmatpush1.bf16.msra.mxu0 0
    %622 = vmatprep.subr.bf16.mxu0 0
    %623 = vmatpush1.bf16.msra.mxu0 0
    %624 = vmatprep.subr.bf16.mxu0 0
    %625 = vmatpush1.bf16.msra.mxu0 0
    %626 = vmatprep.subr.bf16.mxu0 0
    %627 = vmatpush1.bf16.msra.mxu0 0
    %628 = vmatprep.subr.bf16.mxu0 0
    %629 = vmatpush1.bf16.msra.mxu0 0
    %630 = vmatprep.subr.bf16.mxu0 0
    %631 = vmatpush1.bf16.msra.mxu0 0
    %632 = vmatprep.subr.bf16.mxu0 0
    %633 = vmatpush1.bf16.msra.mxu0 0
    %634 = vmatprep.subr.bf16.mxu0 0
    %635 = vmatpush1.bf16.msra.mxu0 0
    %636 = vmatprep.subr.bf16.mxu0 0
    %637 = vmatpush1.bf16.msra.mxu0 0
    %638 = vmatprep.subr.bf16.mxu0 0
    %639 = vmatpush1.bf16.msra.mxu0 0
    %640 = vmatprep.mubr.bf16.mxu0 0
    %641 = vmatmul.mubr.bf16.gmra.mrb[0].mxu0 %v597
    %v642 = vpop.f32.mrb[0].mxu0
    %v643 = vadd.f32 %v518, %v642
    %v644 = vpop.f32.mrb[0].mxu0
    %v645 = vadd.f32 %v520, %v644
    %v646 = vpop.f32.mrb[0].mxu0
    %v647 = vadd.f32 %v522, %v646
    %v648 = vpop.f32.mrb[0].mxu0
    %v649 = vadd.f32 %v524, %v648
    %650 = vmatprep.mubr.bf16.mxu0 0
    %651 = vmatmul.mubr.bf16.gmra.mrb[0].mxu0 %v600
    %v652 = vpop.f32.mrb[0].mxu0
    %v653 = vadd.f32 %v528, %v652
    %v654 = vpop.f32.mrb[0].mxu0
    %v655 = vadd.f32 %v530, %v654
    %v656 = vpop.f32.mrb[0].mxu0
    %v657 = vadd.f32 %v532, %v656
    %v658 = vpop.f32.mrb[0].mxu0
    %v659 = vadd.f32 %v534, %v658
    %660 = vmatprep.mubr.bf16.mxu0 0
    %661 = vmatmul.mubr.bf16.gmra.mrb[0].mxu0 %v603
    %v662 = vpop.f32.mrb[0].mxu0
    %v663 = vadd.f32 %v538, %v662
    %v664 = vpop.f32.mrb[0].mxu0
    %v665 = vadd.f32 %v540, %v664
    %v666 = vpop.f32.mrb[0].mxu0
    %v667 = vadd.f32 %v542, %v666
    %v668 = vpop.f32.mrb[0].mxu0
    %v669 = vadd.f32 %v544, %v668
    %670 = vmatprep.mubr.bf16.mxu0 0
    %671 = vmatmul.mubr.bf16.gmra.mrb[0].mxu0 %v606
    %v672 = vpop.f32.mrb[0].mxu0
    %v673 = vadd.f32 %v548, %v672
    %v674 = vpop.f32.mrb[0].mxu0
    %v675 = vadd.f32 %v550, %v674
    %v676 = vpop.f32.mrb[0].mxu0
    %v677 = vadd.f32 %v552, %v676
    %v678 = vpop.f32.mrb[0].mxu0
    %v679 = vadd.f32 %v554, %v678
    %680 = vdwg.mxu0
    %v681 = vld [vmem:[#allocation7] sm:$0x3]
    %v683 = vlaneseq
    %v684 = vshrl.u32 %v683, 7
    %v685 = vsub.s32 0, %v684
    %v686 = vrot.slane %v681, %v685
    %v687 = vlaneseq
    %v688 = vshrl.u32 %v687, 7
    %v689 = vsub.s32 1, %v688
    %v690 = vrot.slane %v681, %v689
    %v693 = vadd.f32 %v643, %v686
    %v694 = vadd.f32 %v645, %v690
    %v695 = vadd.f32 %v647, %v686
    %v696 = vadd.f32 %v649, %v690
    %v697 = vadd.f32 %v653, %v686
    %v698 = vadd.f32 %v655, %v690
    %v699 = vadd.f32 %v657, %v686
    %v700 = vadd.f32 %v659, %v690
    %v701 = vadd.f32 %v663, %v686
    %v702 = vadd.f32 %v665, %v690
    %v703 = vadd.f32 %v667, %v686
    %v704 = vadd.f32 %v669, %v690
    %v705 = vadd.f32 %v673, %v686
    %v706 = vadd.f32 %v675, %v690
    %v707 = vadd.f32 %v677, %v686
    %v708 = vadd.f32 %v679, %v690
    %v709 = vmax.f32 %v693, 0.0
    %v710 = vmax.f32 %v694, 0.0
    %v711 = vmax.f32 %v695, 0.0
    %v712 = vmax.f32 %v696, 0.0
    %v713 = vmax.f32 %v697, 0.0
    %v714 = vmax.f32 %v698, 0.0
    %v715 = vmax.f32 %v699, 0.0
    %v716 = vmax.f32 %v700, 0.0
    %v717 = vmax.f32 %v701, 0.0
    %v718 = vmax.f32 %v702, 0.0
    %v719 = vmax.f32 %v703, 0.0
    %v720 = vmax.f32 %v704, 0.0
    %v721 = vmax.f32 %v705, 0.0
    %v722 = vmax.f32 %v706, 0.0
    %v723 = vmax.f32 %v707, 0.0
    %v724 = vmax.f32 %v708, 0.0
    %v725 = vpack.c.bf16 %v711, %v709
    %v726 = vpack.c.bf16 %v712, %v710
    %v727 = vpack.c.bf16 %v715, %v713
    %v728 = vpack.c.bf16 %v716, %v714
    %v729 = vpack.c.bf16 %v719, %v717
    %v730 = vpack.c.bf16 %v720, %v718
    %v731 = vpack.c.bf16 %v723, %v721
    %v732 = vpack.c.bf16 %v724, %v722
    %v733 = vld [vmem:[%s9] sm:$0xf]
    %v734 = vld [vmem:[%s9 + $0x4] sm:$0xf]
    %v735 = vld [vmem:[%s9 + $0x8] sm:$0xf]
    %v736 = vld [vmem:[%s9 + $0xc] sm:$0xf]
    %v737 = vld [vmem:[%s9 + $0x10] sm:$0xf]
    %v738 = vld [vmem:[%s9 + $0x14] sm:$0xf]
    %v739 = vld [vmem:[%s9 + $0x18] sm:$0xf]
    %v740 = vld [vmem:[%s9 + $0x1c] sm:$0xf]
    %v741 = vld [vmem:[%s9 + $0x20] sm:$0xf]
    %v742 = vld [vmem:[%s9 + $0x24] sm:$0xf]
    %v743 = vld [vmem:[%s9 + $0x28] sm:$0xf]
    %v744 = vld [vmem:[%s9 + $0x2c] sm:$0xf]
    %v745 = vld [vmem:[%s9 + $0x30] sm:$0xf]
    %v746 = vld [vmem:[%s9 + $0x34] sm:$0xf]
    %v747 = vld [vmem:[%s9 + $0x38] sm:$0xf]
    %v748 = vld [vmem:[%s9 + $0x3c] sm:$0xf]
    %v749 = vld [vmem:[%s9 + $0x40] sm:$0xf]
    %v750 = vld [vmem:[%s9 + $0x44] sm:$0xf]
    %v751 = vld [vmem:[%s9 + $0x48] sm:$0xf]
    %v752 = vld [vmem:[%s9 + $0x4c] sm:$0xf]
    %v753 = vld [vmem:[%s9 + $0x50] sm:$0xf]
    %v754 = vld [vmem:[%s9 + $0x54] sm:$0xf]
    %v755 = vld [vmem:[%s9 + $0x58] sm:$0xf]
    %v756 = vld [vmem:[%s9 + $0x5c] sm:$0xf]
    %v757 = vld [vmem:[%s9 + $0x60] sm:$0xf]
    %v758 = vld [vmem:[%s9 + $0x64] sm:$0xf]
    %v759 = vld [vmem:[%s9 + $0x68] sm:$0xf]
    %v760 = vld [vmem:[%s9 + $0x6c] sm:$0xf]
    %v761 = vld [vmem:[%s9 + $0x70] sm:$0xf]
    %v762 = vld [vmem:[%s9 + $0x74] sm:$0xf]
    %v763 = vld [vmem:[%s9 + $0x78] sm:$0xf]
    %v764 = vld [vmem:[%s9 + $0x7c] sm:$0xf]
    %v765 = vld [vmem:[#allocation9] sm:$0x1]
    %v767 = vlaneseq
    %v768 = vshrl.u32 %v767, 7
    %v769 = vsub.s32 0, %v768
    %v770 = vrot.slane %v765, %v769
    %v804 = vunpack.c.l.b16 %v733
    %v805 = vunpack.c.l.b16 %v734
    %v806 = vunpack.c.l.b16 %v735
    %v807 = vunpack.c.l.b16 %v736
    %v808 = vunpack.c.l.b16 %v737
    %v809 = vunpack.c.l.b16 %v738
    %v810 = vunpack.c.l.b16 %v739
    %v811 = vunpack.c.l.b16 %v740
    %v812 = vunpack.c.l.b16 %v741
    %v813 = vunpack.c.l.b16 %v742
    %v814 = vunpack.c.l.b16 %v743
    %v815 = vunpack.c.l.b16 %v744
    %v816 = vunpack.c.l.b16 %v745
    %v817 = vunpack.c.l.b16 %v746
    %v818 = vunpack.c.l.b16 %v747
    %v819 = vunpack.c.l.b16 %v748
    %v820 = vunpack.c.l.b16 %v749
    %v821 = vunpack.c.l.b16 %v750
    %v822 = vunpack.c.l.b16 %v751
    %v823 = vunpack.c.l.b16 %v752
    %v824 = vunpack.c.l.b16 %v753
    %v825 = vunpack.c.l.b16 %v754
    %v826 = vunpack.c.l.b16 %v755
    %v827 = vunpack.c.l.b16 %v756
    %v828 = vunpack.c.l.b16 %v757
    %v829 = vunpack.c.l.b16 %v758
    %v830 = vunpack.c.l.b16 %v759
    %v831 = vunpack.c.l.b16 %v760
    %v832 = vunpack.c.l.b16 %v761
    %v833 = vunpack.c.l.b16 %v762
    %v834 = vunpack.c.l.b16 %v763
    %v835 = vunpack.c.l.b16 %v764
    %v836 = vpack.c.b16 %v805, %v804
    %v837 = vpack.c.b16 %v807, %v806
    %v838 = vpack.c.b16 %v809, %v808
    %v839 = vpack.c.b16 %v811, %v810
    %v840 = vpack.c.b16 %v813, %v812
    %v841 = vpack.c.b16 %v815, %v814
    %v842 = vpack.c.b16 %v817, %v816
    %v843 = vpack.c.b16 %v819, %v818
    %v844 = vpack.c.b16 %v821, %v820
    %v845 = vpack.c.b16 %v823, %v822
    %v846 = vpack.c.b16 %v825, %v824
    %v847 = vpack.c.b16 %v827, %v826
    %v848 = vpack.c.b16 %v829, %v828
    %v849 = vpack.c.b16 %v831, %v830
    %v850 = vpack.c.b16 %v833, %v832
    %v851 = vpack.c.b16 %v835, %v834
    %868 = vmatprep.subr.bf16.mxu0 0
    %869 = vmatpush1.bf16.msra.mxu0 %v836
    %870 = vmatprep.subr.bf16.mxu0 0
    %871 = vmatpush1.bf16.msra.mxu0 %v837
    %872 = vmatprep.subr.bf16.mxu0 0
    %873 = vmatpush1.bf16.msra.mxu0 %v838
    %874 = vmatprep.subr.bf16.mxu0 0
    %875 = vmatpush1.bf16.msra.mxu0 %v839
    %876 = vmatprep.subr.bf16.mxu0 0
    %877 = vmatpush1.bf16.msra.mxu0 %v840
    %878 = vmatprep.subr.bf16.mxu0 0
    %879 = vmatpush1.bf16.msra.mxu0 %v841
    %880 = vmatprep.subr.bf16.mxu0 0
    %881 = vmatpush1.bf16.msra.mxu0 %v842
    %882 = vmatprep.subr.bf16.mxu0 0
    %883 = vmatpush1.bf16.msra.mxu0 %v843
    %884 = vmatprep.subr.bf16.mxu0 0
    %885 = vmatpush1.bf16.msra.mxu0 %v844
    %886 = vmatprep.subr.bf16.mxu0 0
    %887 = vmatpush1.bf16.msra.mxu0 %v845
    %888 = vmatprep.subr.bf16.mxu0 0
    %889 = vmatpush1.bf16.msra.mxu0 %v846
    %890 = vmatprep.subr.bf16.mxu0 0
    %891 = vmatpush1.bf16.msra.mxu0 %v847
    %892 = vmatprep.subr.bf16.mxu0 0
    %893 = vmatpush1.bf16.msra.mxu0 %v848
    %894 = vmatprep.subr.bf16.mxu0 0
    %895 = vmatpush1.bf16.msra.mxu0 %v849
    %896 = vmatprep.subr.bf16.mxu0 0
    %897 = vmatpush1.bf16.msra.mxu0 %v850
    %898 = vmatprep.subr.bf16.mxu0 0
    %899 = vmatpush1.bf16.msra.mxu0 %v851
    %900 = vmatprep.mubr.bf16.mxu0 %v726
    %901 = vmatmul.mubr.bf16.gmra.mrb[0].mxu0 %v725
    %v902 = vpop.f32.mrb[0].mxu0
    %v903 = vadd.f32 %v770, %v902
    %v904 = vpop.f32.mrb[0].mxu0
    %v905 = vpop.f32.mrb[0].mxu0
    %v906 = vadd.f32 %v770, %v905
    %v907 = vpop.f32.mrb[0].mxu0
    %908 = vmatprep.mubr.bf16.mxu0 %v728
    %909 = vmatmul.mubr.bf16.gmra.mrb[0].mxu0 %v727
    %v910 = vpop.f32.mrb[0].mxu0
    %v911 = vadd.f32 %v770, %v910
    %v912 = vpop.f32.mrb[0].mxu0
    %v913 = vpop.f32.mrb[0].mxu0
    %v914 = vadd.f32 %v770, %v913
    %v915 = vpop.f32.mrb[0].mxu0
    %916 = vmatprep.mubr.bf16.mxu0 %v730
    %917 = vmatmul.mubr.bf16.gmra.mrb[0].mxu0 %v729
    %v918 = vpop.f32.mrb[0].mxu0
    %v919 = vadd.f32 %v770, %v918
    %v920 = vpop.f32.mrb[0].mxu0
    %v921 = vpop.f32.mrb[0].mxu0
    %v922 = vadd.f32 %v770, %v921
    %v923 = vpop.f32.mrb[0].mxu0
    %924 = vmatprep.mubr.bf16.mxu0 %v732
    %925 = vmatmul.mubr.bf16.gmra.mrb[0].mxu0 %v731
    %v926 = vpop.f32.mrb[0].mxu0
    %v927 = vadd.f32 %v770, %v926
    %v928 = vpop.f32.mrb[0].mxu0
    %v929 = vpop.f32.mrb[0].mxu0
    %v930 = vadd.f32 %v770, %v929
    %v931 = vpop.f32.mrb[0].mxu0
    %932 = vdwg.mxu0
    %v933 = vmax.f32 %v903, 0.0
    %v934 = vmax.f32 %v906, 0.0
    %v935 = vmax.f32 %v911, 0.0
    %v936 = vmax.f32 %v914, 0.0
    %v937 = vmax.f32 %v919, 0.0
    %v938 = vmax.f32 %v922, 0.0
    %v939 = vmax.f32 %v927, 0.0
    %v940 = vmax.f32 %v930, 0.0
    %v941 = vld [vmem:[%s11] sm:$0x7]
    %v942 = vld [vmem:[%s12] sm:$0x1]
    %v943 = vlaneseq
    %v944 = vshrl.u32 %v943, 7
    %v945 = vsub.s32 0, %v944
    %v946 = vrot.slane %v941, %v945
    %v947 = vmul.f32 %v933, %v946
    %v948 = vmul.f32 %v934, %v946
    %v949 = vmul.f32 %v935, %v946
    %v950 = vmul.f32 %v936, %v946
    %v951 = vmul.f32 %v937, %v946
    %v952 = vmul.f32 %v938, %v946
    %v953 = vmul.f32 %v939, %v946
    %v954 = vmul.f32 %v940, %v946
    %955 = vadd.xlane.f32.xlu0 %v947
    %v956 = vpop.xlane.xlu0 %955
    %957 = vadd.xlane.f32.xlu0 %v948
    %v958 = vpop.xlane.xlu0 %957
    %959 = vadd.xlane.f32.xlu0 %v949
    %v960 = vpop.xlane.xlu0 %959
    %961 = vadd.xlane.f32.xlu0 %v950
    %v962 = vpop.xlane.xlu0 %961
    %963 = vadd.xlane.f32.xlu0 %v951
    %v964 = vpop.xlane.xlu0 %963
    %965 = vadd.xlane.f32.xlu0 %v952
    %v966 = vpop.xlane.xlu0 %965
    %967 = vadd.xlane.f32.xlu0 %v953
    %v968 = vpop.xlane.xlu0 %967
    %969 = vadd.xlane.f32.xlu0 %v954
    %v970 = vpop.xlane.xlu0 %969
    %v972 = vlaneseq
    %v973 = vshrl.u32 %v972, 7
    %v974 = vsub.s32 0, %v973
    %v975 = vrot.slane %v942, %v974
    %v977 = vadd.f32 %v956, %v975
    %v978 = vadd.f32 %v958, %v975
    %v979 = vadd.f32 %v960, %v975
    %v980 = vadd.f32 %v962, %v975
    %v981 = vadd.f32 %v964, %v975
    %v982 = vadd.f32 %v966, %v975
    %v983 = vadd.f32 %v968, %v975
    %v984 = vadd.f32 %v970, %v975
    %v985 = vxor.u32 %v977, 2147483648
    %v986 = vxor.u32 %v978, 2147483648
    %v987 = vxor.u32 %v979, 2147483648
    %v988 = vxor.u32 %v980, 2147483648
    %v989 = vxor.u32 %v981, 2147483648
    %v990 = vxor.u32 %v982, 2147483648
    %v991 = vxor.u32 %v983, 2147483648
    %v992 = vxor.u32 %v984, 2147483648
    %v993 = vmul.f32 %v985, 1.442695
    %v994 = vpow.pop %v993
    %v995 = vmul.f32 %v986, 1.442695
    %v996 = vpow.pop %v995
    %v997 = vmul.f32 %v987, 1.442695
    %v998 = vpow.pop %v997
    %v999 = vmul.f32 %v988, 1.442695
    %v1000 = vpow.pop %v999
    %v1001 = vmul.f32 %v989, 1.442695
    %v1002 = vpow.pop %v1001
    %v1003 = vmul.f32 %v990, 1.442695
    %v1004 = vpow.pop %v1003
    %v1005 = vmul.f32 %v991, 1.442695
    %v1006 = vpow.pop %v1005
    %v1007 = vmul.f32 %v992, 1.442695
    %v1008 = vpow.pop %v1007
    %v1009 = vadd.f32 %v994, 1.0
    %v1010 = vadd.f32 %v996, 1.0
    %v1011 = vadd.f32 %v998, 1.0
    %v1012 = vadd.f32 %v1000, 1.0
    %v1013 = vadd.f32 %v1002, 1.0
    %v1014 = vadd.f32 %v1004, 1.0
    %v1015 = vadd.f32 %v1006, 1.0
    %v1016 = vadd.f32 %v1008, 1.0
    %v1017 = vrcp.pop %v1009
    %v1018 = vmul.f32 1.0, %v1017
    %v1019 = vrcp.pop %v1010
    %v1020 = vmul.f32 1.0, %v1019
    %v1021 = vrcp.pop %v1011
    %v1022 = vmul.f32 1.0, %v1021
    %v1023 = vrcp.pop %v1012
    %v1024 = vmul.f32 1.0, %v1023
    %v1025 = vrcp.pop %v1013
    %v1026 = vmul.f32 1.0, %v1025
    %v1027 = vrcp.pop %v1014
    %v1028 = vmul.f32 1.0, %v1027
    %v1029 = vrcp.pop %v1015
    %v1030 = vmul.f32 1.0, %v1029
    %v1031 = vrcp.pop %v1016
    %v1032 = vmul.f32 1.0, %v1031
    %v1033 = vlaneseq
    %v1034 = vshrl.u32 %v1033, 7
    %v1035 = vsub.s32 1, %v1034
    %v1036 = vrot.slane %v941, %v1035
    %v1037 = vmul.f32 %v933, %v1036
    %v1038 = vmul.f32 %v934, %v1036
    %v1039 = vmul.f32 %v935, %v1036
    %v1040 = vmul.f32 %v936, %v1036
    %v1041 = vmul.f32 %v937, %v1036
    %v1042 = vmul.f32 %v938, %v1036
    %v1043 = vmul.f32 %v939, %v1036
    %v1044 = vmul.f32 %v940, %v1036
    %1045 = vadd.xlane.f32.xlu0 %v1037
    %v1046 = vpop.xlane.xlu0 %1045
    %1047 = vadd.xlane.f32.xlu0 %v1038
    %v1048 = vpop.xlane.xlu0 %1047
    %1049 = vadd.xlane.f32.xlu0 %v1039
    %v1050 = vpop.xlane.xlu0 %1049
    %1051 = vadd.xlane.f32.xlu0 %v1040
    %v1052 = vpop.xlane.xlu0 %1051
    %1053 = vadd.xlane.f32.xlu0 %v1041
    %v1054 = vpop.xlane.xlu0 %1053
    %1055 = vadd.xlane.f32.xlu0 %v1042
    %v1056 = vpop.xlane.xlu0 %1055
    %1057 = vadd.xlane.f32.xlu0 %v1043
    %v1058 = vpop.xlane.xlu0 %1057
    %1059 = vadd.xlane.f32.xlu0 %v1044
    %v1060 = vpop.xlane.xlu0 %1059
    %v1061 = vadd.f32 %v1046, %v975
    %v1062 = vadd.f32 %v1048, %v975
    %v1063 = vadd.f32 %v1050, %v975
    %v1064 = vadd.f32 %v1052, %v975
    %v1065 = vadd.f32 %v1054, %v975
    %v1066 = vadd.f32 %v1056, %v975
    %v1067 = vadd.f32 %v1058, %v975
    %v1068 = vadd.f32 %v1060, %v975
    %v1069 = vxor.u32 %v1061, 2147483648
    %v1070 = vxor.u32 %v1062, 2147483648
    %v1071 = vxor.u32 %v1063, 2147483648
    %v1072 = vxor.u32 %v1064, 2147483648
    %v1073 = vxor.u32 %v1065, 2147483648
    %v1074 = vxor.u32 %v1066, 2147483648
    %v1075 = vxor.u32 %v1067, 2147483648
    %v1076 = vxor.u32 %v1068, 2147483648
    %v1077 = vmul.f32 %v1069, 1.442695
    %v1078 = vpow.pop %v1077
    %v1079 = vmul.f32 %v1070, 1.442695
    %v1080 = vpow.pop %v1079
    %v1081 = vmul.f32 %v1071, 1.442695
    %v1082 = vpow.pop %v1081
    %v1083 = vmul.f32 %v1072, 1.442695
    %v1084 = vpow.pop %v1083
    %v1085 = vmul.f32 %v1073, 1.442695
    %v1086 = vpow.pop %v1085
    %v1087 = vmul.f32 %v1074, 1.442695
    %v1088 = vpow.pop %v1087
    %v1089 = vmul.f32 %v1075, 1.442695
    %v1090 = vpow.pop %v1089
    %v1091 = vmul.f32 %v1076, 1.442695
    %v1092 = vpow.pop %v1091
    %v1093 = vadd.f32 %v1078, 1.0
    %v1094 = vadd.f32 %v1080, 1.0
    %v1095 = vadd.f32 %v1082, 1.0
    %v1096 = vadd.f32 %v1084, 1.0
    %v1097 = vadd.f32 %v1086, 1.0
    %v1098 = vadd.f32 %v1088, 1.0
    %v1099 = vadd.f32 %v1090, 1.0
    %v1100 = vadd.f32 %v1092, 1.0
    %v1101 = vrcp.pop %v1093
    %v1102 = vmul.f32 1.0, %v1101
    %v1103 = vrcp.pop %v1094
    %v1104 = vmul.f32 1.0, %v1103
    %v1105 = vrcp.pop %v1095
    %v1106 = vmul.f32 1.0, %v1105
    %v1107 = vrcp.pop %v1096
    %v1108 = vmul.f32 1.0, %v1107
    %v1109 = vrcp.pop %v1097
    %v1110 = vmul.f32 1.0, %v1109
    %v1111 = vrcp.pop %v1098
    %v1112 = vmul.f32 1.0, %v1111
    %v1113 = vrcp.pop %v1099
    %v1114 = vmul.f32 1.0, %v1113
    %v1115 = vrcp.pop %v1100
    %v1116 = vmul.f32 1.0, %v1115
    %v1117 = vlaneseq
    %v1118 = vshrl.u32 %v1117, 7
    %v1119 = vsub.s32 2, %v1118
    %v1120 = vrot.slane %v941, %v1119
    %v1121 = vmul.f32 %v933, %v1120
    %v1122 = vmul.f32 %v934, %v1120
    %v1123 = vmul.f32 %v935, %v1120
    %v1124 = vmul.f32 %v936, %v1120
    %v1125 = vmul.f32 %v937, %v1120
    %v1126 = vmul.f32 %v938, %v1120
    %v1127 = vmul.f32 %v939, %v1120
    %v1128 = vmul.f32 %v940, %v1120
    %1129 = vadd.xlane.f32.xlu0 %v1121
    %v1130 = vpop.xlane.xlu0 %1129
    %1131 = vadd.xlane.f32.xlu0 %v1122
    %v1132 = vpop.xlane.xlu0 %1131
    %1133 = vadd.xlane.f32.xlu0 %v1123
    %v1134 = vpop.xlane.xlu0 %1133
    %1135 = vadd.xlane.f32.xlu0 %v1124
    %v1136 = vpop.xlane.xlu0 %1135
    %1137 = vadd.xlane.f32.xlu0 %v1125
    %v1138 = vpop.xlane.xlu0 %1137
    %1139 = vadd.xlane.f32.xlu0 %v1126
    %v1140 = vpop.xlane.xlu0 %1139
    %1141 = vadd.xlane.f32.xlu0 %v1127
    %v1142 = vpop.xlane.xlu0 %1141
    %1143 = vadd.xlane.f32.xlu0 %v1128
    %v1144 = vpop.xlane.xlu0 %1143
    %v1145 = vadd.f32 %v1130, %v975
    %v1146 = vadd.f32 %v1132, %v975
    %v1147 = vadd.f32 %v1134, %v975
    %v1148 = vadd.f32 %v1136, %v975
    %v1149 = vadd.f32 %v1138, %v975
    %v1150 = vadd.f32 %v1140, %v975
    %v1151 = vadd.f32 %v1142, %v975
    %v1152 = vadd.f32 %v1144, %v975
    %v1153 = vxor.u32 %v1145, 2147483648
    %v1154 = vxor.u32 %v1146, 2147483648
    %v1155 = vxor.u32 %v1147, 2147483648
    %v1156 = vxor.u32 %v1148, 2147483648
    %v1157 = vxor.u32 %v1149, 2147483648
    %v1158 = vxor.u32 %v1150, 2147483648
    %v1159 = vxor.u32 %v1151, 2147483648
    %v1160 = vxor.u32 %v1152, 2147483648
    %v1161 = vmul.f32 %v1153, 1.442695
    %v1162 = vpow.pop %v1161
    %v1163 = vmul.f32 %v1154, 1.442695
    %v1164 = vpow.pop %v1163
    %v1165 = vmul.f32 %v1155, 1.442695
    %v1166 = vpow.pop %v1165
    %v1167 = vmul.f32 %v1156, 1.442695
    %v1168 = vpow.pop %v1167
    %v1169 = vmul.f32 %v1157, 1.442695
    %v1170 = vpow.pop %v1169
    %v1171 = vmul.f32 %v1158, 1.442695
    %v1172 = vpow.pop %v1171
    %v1173 = vmul.f32 %v1159, 1.442695
    %v1174 = vpow.pop %v1173
    %v1175 = vmul.f32 %v1160, 1.442695
    %v1176 = vpow.pop %v1175
    %v1177 = vadd.f32 %v1162, 1.0
    %v1178 = vadd.f32 %v1164, 1.0
    %v1179 = vadd.f32 %v1166, 1.0
    %v1180 = vadd.f32 %v1168, 1.0
    %v1181 = vadd.f32 %v1170, 1.0
    %v1182 = vadd.f32 %v1172, 1.0
    %v1183 = vadd.f32 %v1174, 1.0
    %v1184 = vadd.f32 %v1176, 1.0
    %v1185 = vrcp.pop %v1177
    %v1186 = vmul.f32 1.0, %v1185
    %v1187 = vrcp.pop %v1178
    %v1188 = vmul.f32 1.0, %v1187
    %v1189 = vrcp.pop %v1179
    %v1190 = vmul.f32 1.0, %v1189
    %v1191 = vrcp.pop %v1180
    %v1192 = vmul.f32 1.0, %v1191
    %v1193 = vrcp.pop %v1181
    %v1194 = vmul.f32 1.0, %v1193
    %v1195 = vrcp.pop %v1182
    %v1196 = vmul.f32 1.0, %v1195
    %v1197 = vrcp.pop %v1183
    %v1198 = vmul.f32 1.0, %v1197
    %v1199 = vrcp.pop %v1184
    %v1200 = vmul.f32 1.0, %v1199
    %v1201 = vld [vmem:[%s13] sm:$0x7]
    %1203 = vset.pattern.permute.xlu0 0
    %1204 = vperm.xlu0 %1203, %v1018
    %v1205 = vpop.permute.xlu0 %1204
    %1208 = vset.pattern.permute.xlu0 0
    %1209 = vperm.xlu0 %1208, %v1020
    %v1210 = vpop.permute.xlu0 %1209
    %1213 = vset.pattern.permute.xlu0 0
    %1214 = vperm.xlu0 %1213, %v1022
    %v1215 = vpop.permute.xlu0 %1214
    %1218 = vset.pattern.permute.xlu0 0
    %1219 = vperm.xlu0 %1218, %v1024
    %v1220 = vpop.permute.xlu0 %1219
    %1223 = vset.pattern.permute.xlu0 0
    %1224 = vperm.xlu0 %1223, %v1026
    %v1225 = vpop.permute.xlu0 %1224
    %1228 = vset.pattern.permute.xlu0 0
    %1229 = vperm.xlu0 %1228, %v1028
    %v1230 = vpop.permute.xlu0 %1229
    %1233 = vset.pattern.permute.xlu0 0
    %1234 = vperm.xlu0 %1233, %v1030
    %v1235 = vpop.permute.xlu0 %1234
    %1238 = vset.pattern.permute.xlu0 0
    %1239 = vperm.xlu0 %1238, %v1032
    %v1240 = vpop.permute.xlu0 %1239
    %v1242 = vlaneseq
    %v1243 = vshrl.u32 %v1242, 7
    %v1244 = vsub.s32 0, %v1243
    %v1245 = vrot.slane %v1201, %v1244
    %v1246 = vmul.f32 %v1205, %v1245
    %v1247 = vmul.f32 %v1210, %v1245
    %v1248 = vmul.f32 %v1215, %v1245
    %v1249 = vmul.f32 %v1220, %v1245
    %v1250 = vmul.f32 %v1225, %v1245
    %v1251 = vmul.f32 %v1230, %v1245
    %v1252 = vmul.f32 %v1235, %v1245
    %v1253 = vmul.f32 %v1240, %v1245
    %1255 = vset.pattern.permute.xlu0 1
    %1256 = vperm.xlu0 %1255, %v1102
    %v1257 = vpop.permute.xlu0 %1256
    %1260 = vset.pattern.permute.xlu0 1
    %1261 = vperm.xlu0 %1260, %v1104
    %v1262 = vpop.permute.xlu0 %1261
    %1265 = vset.pattern.permute.xlu0 1
    %1266 = vperm.xlu0 %1265, %v1106
    %v1267 = vpop.permute.xlu0 %1266
    %1270 = vset.pattern.permute.xlu0 1
    %1271 = vperm.xlu0 %1270, %v1108
    %v1272 = vpop.permute.xlu0 %1271
    %1275 = vset.pattern.permute.xlu0 1
    %1276 = vperm.xlu0 %1275, %v1110
    %v1277 = vpop.permute.xlu0 %1276
    %1280 = vset.pattern.permute.xlu0 1
    %1281 = vperm.xlu0 %1280, %v1112
    %v1282 = vpop.permute.xlu0 %1281
    %1285 = vset.pattern.permute.xlu0 1
    %1286 = vperm.xlu0 %1285, %v1114
    %v1287 = vpop.permute.xlu0 %1286
    %1290 = vset.pattern.permute.xlu0 1
    %1291 = vperm.xlu0 %1290, %v1116
    %v1292 = vpop.permute.xlu0 %1291
    %v1294 = vlaneseq
    %v1295 = vshrl.u32 %v1294, 7
    %v1296 = vsub.s32 1, %v1295
    %v1297 = vrot.slane %v1201, %v1296
    %v1298 = vmul.f32 %v1257, %v1297
    %v1299 = vmul.f32 %v1262, %v1297
    %v1300 = vmul.f32 %v1267, %v1297
    %v1301 = vmul.f32 %v1272, %v1297
    %v1302 = vmul.f32 %v1277, %v1297
    %v1303 = vmul.f32 %v1282, %v1297
    %v1304 = vmul.f32 %v1287, %v1297
    %v1305 = vmul.f32 %v1292, %v1297
    %v1306 = vadd.f32 %v1246, %v1298
    %v1307 = vadd.f32 %v1247, %v1299
    %v1308 = vadd.f32 %v1248, %v1300
    %v1309 = vadd.f32 %v1249, %v1301
    %v1310 = vadd.f32 %v1250, %v1302
    %v1311 = vadd.f32 %v1251, %v1303
    %v1312 = vadd.f32 %v1252, %v1304
    %v1313 = vadd.f32 %v1253, %v1305
    %1315 = vset.pattern.permute.xlu0 2
    %1316 = vperm.xlu0 %1315, %v1186
    %v1317 = vpop.permute.xlu0 %1316
    %1320 = vset.pattern.permute.xlu0 2
    %1321 = vperm.xlu0 %1320, %v1188
    %v1322 = vpop.permute.xlu0 %1321
    %1325 = vset.pattern.permute.xlu0 2
    %1326 = vperm.xlu0 %1325, %v1190
    %v1327 = vpop.permute.xlu0 %1326
    %1330 = vset.pattern.permute.xlu0 2
    %1331 = vperm.xlu0 %1330, %v1192
    %v1332 = vpop.permute.xlu0 %1331
    %1335 = vset.pattern.permute.xlu0 2
    %1336 = vperm.xlu0 %1335, %v1194
    %v1337 = vpop.permute.xlu0 %1336
    %1340 = vset.pattern.permute.xlu0 2
    %1341 = vperm.xlu0 %1340, %v1196
    %v1342 = vpop.permute.xlu0 %1341
    %1345 = vset.pattern.permute.xlu0 2
    %1346 = vperm.xlu0 %1345, %v1198
    %v1347 = vpop.permute.xlu0 %1346
    %1350 = vset.pattern.permute.xlu0 2
    %1351 = vperm.xlu0 %1350, %v1200
    %v1352 = vpop.permute.xlu0 %1351
    %v1354 = vlaneseq
    %v1355 = vshrl.u32 %v1354, 7
    %v1356 = vsub.s32 2, %v1355
    %v1357 = vrot.slane %v1201, %v1356
    %v1358 = vmul.f32 %v1317, %v1357
    %v1359 = vmul.f32 %v1322, %v1357
    %v1360 = vmul.f32 %v1327, %v1357
    %v1361 = vmul.f32 %v1332, %v1357
    %v1362 = vmul.f32 %v1337, %v1357
    %v1363 = vmul.f32 %v1342, %v1357
    %v1364 = vmul.f32 %v1347, %v1357
    %v1365 = vmul.f32 %v1352, %v1357
    %v1366 = vadd.f32 %v1306, %v1358
    %v1367 = vadd.f32 %v1307, %v1359
    %v1368 = vadd.f32 %v1308, %v1360
    %v1369 = vadd.f32 %v1309, %v1361
    %v1370 = vadd.f32 %v1310, %v1362
    %v1371 = vadd.f32 %v1311, %v1363
    %v1372 = vadd.f32 %v1312, %v1364
    %v1373 = vadd.f32 %v1313, %v1365
    %v1374 = vld [vmem:[%s14] sm:$0x1]
    %v1376 = vlaneseq
    %v1377 = vshrl.u32 %v1376, 7
    %v1378 = vsub.s32 0, %v1377
    %v1379 = vrot.slane %v1374, %v1378
    %v1381 = vadd.f32 %v1366, %v1379
    %v1382 = vadd.f32 %v1367, %v1379
    %v1383 = vadd.f32 %v1368, %v1379
    %v1384 = vadd.f32 %v1369, %v1379
    %v1385 = vadd.f32 %v1370, %v1379
    %v1386 = vadd.f32 %v1371, %v1379
    %v1387 = vadd.f32 %v1372, %v1379
    %v1388 = vadd.f32 %v1373, %v1379
    %1389 = vst.msk [vmem:[%s15] sm:$0xff] %vm470, %v1381
    %1390 = vst.msk [vmem:[%s15 + $0x8] sm:$0xff] %vm470, %v1382
    %1391 = vst.msk [vmem:[%s15 + $0x10] sm:$0xff] %vm470, %v1383
    %1392 = vst.msk [vmem:[%s15 + $0x18] sm:$0xff] %vm470, %v1384
    %1393 = vst.msk [vmem:[%s15 + $0x20] sm:$0xff] %vm470, %v1385
    %1394 = vst.msk [vmem:[%s15 + $0x28] sm:$0xff] %vm470, %v1386
    %1395 = vst.msk [vmem:[%s15 + $0x30] sm:$0xff] %vm470, %v1387
    %1396 = vst.msk [vmem:[%s15 + $0x38] sm:$0xff] %vm470, %v1388
    // Predicated region
    $region82: #{tpu_custom_call.1} parent=1 // pred_check
      _
    $region83: #{tpu_custom_call.1} parent=1 // pred_check_branch
      %1398 = sbr.rel (0) target = $region85
    $region84: #{tpu_custom_call.1} parent=1 // pred_region
      _
    $region85: #{tpu_custom_call.1} parent=1 // pred_fallthru
      _
    // Predicated region
    $region86: #{tpu_custom_call.1} parent=1 // pred_check
      _
    $region87: #{tpu_custom_call.1} parent=1 // pred_check_branch
      %1400 = sbr.rel (0) target = $region89
    $region88: #{tpu_custom_call.1} parent=1 // pred_region
      _
    $region89: #{tpu_custom_call.1} parent=1 // pred_fallthru
      _
    %1401 = vsyncpa [#allocation3], 1
    %1402 = vsyncpa [#allocation5], 1
    %1403 = vsyncpa [#allocation8], 1

</llo_original>
